<compile_context>
chip_gen: v5e
topology: v5e:2x2
jax: 0.10.0
libtpu: 0.0.40
codegen_flags: <defaults>
</compile_context>

<pallas_src>
import jax
import jax.numpy as jnp
import numpy as np
from jax.experimental import pallas as pl
from jax.experimental.pallas import tpu as pltpu

INPUT_DIM = 20
HIDDEN_DIM = 10
B = 8            # batch: multiple of 8 sublanes -> no batch padding, exact BN stats
NEG_SLOPE = 0.2
BN_EPS = 0.8

ENC_DIMS = [INPUT_DIM, 130, 120, 110, 100, 90, 80, 70, HIDDEN_DIM]
DEC_DIMS = [HIDDEN_DIM, 70, 80, 90, 100, 110, 120, 130, INPUT_DIM]
LAYER_DIMS = list(zip(ENC_DIMS[:-1], ENC_DIMS[1:])) + list(zip(DEC_DIMS[:-1], DEC_DIMS[1:]))
N_LAYERS = len(LAYER_DIMS)   # 16 linear layers total
N_BN = 6                     # decoder blocks 1..6 carry BatchNorm1d

BIAS_P = 256                 # bias/BN-param lane padding (covers the 130-wide layers)


def _pad128(n):
    return ((n + 127) // 128) * 128


# Per-layer padded (in, out) dims and the three weight-stack index tables.
PADDED_DIMS = [(_pad128(din), _pad128(dout)) for (din, dout) in LAYER_DIMS]
SQ_IDX = {li: k for k, li in enumerate(i for i, d in enumerate(PADDED_DIMS) if d == (128, 128))}
WIDE_IDX = {li: k for k, li in enumerate(i for i, d in enumerate(PADDED_DIMS) if d == (128, 256))}
TALL_IDX = {li: k for k, li in enumerate(i for i, d in enumerate(PADDED_DIMS) if d == (256, 128))}
N_SQ, N_WIDE, N_TALL = len(SQ_IDX), len(WIDE_IDX), len(TALL_IDX)   # 12, 2, 2


def _leaky(h):
    return jnp.where(h > 0, h, NEG_SLOPE * h)


def autoencoder_kernel(x_ref, b_ref, g_ref, beta_ref,
                       w_sq_hbm, w_wide_hbm, w_tall_hbm,
                       out_ref,
                       w_sq, w_wide, w_tall, sems):
    # Kick off all weight DMAs immediately; wait for each slab right before its
    # first use so the bulk (square-stack, 768 KiB) copy hides under layers 0-1.
    cp_wide = pltpu.make_async_copy(w_wide_hbm, w_wide, sems.at[0])
    cp_tall = pltpu.make_async_copy(w_tall_hbm, w_tall, sems.at[1])
    cp_sq = pltpu.make_async_copy(w_sq_hbm, w_sq, sems.at[2])
    cp_wide.start()
    cp_tall.start()
    cp_sq.start()

    def weight(i):
        if i in SQ_IDX:
            return w_sq[SQ_IDX[i]]
        if i in WIDE_IDX:
            return w_wide[WIDE_IDX[i]]
        return w_tall[TALL_IDX[i]]

    def linear(h, i):
        dout_pad = PADDED_DIMS[i][1]
        y = jnp.dot(h, weight(i), preferred_element_type=jnp.float32)
        return y + b_ref[i, :, :dout_pad]

    h = x_ref[...]                                   # (B, 128) f32

    # ---------------- encoder: 7 x (Linear + LeakyReLU), then Linear + Tanh ----------------
    cp_wide.wait()                                   # layer 0 weights (128x256)
    h = _leaky(linear(h, 0))
    cp_tall.wait()                                   # layer 1 weights (256x128)
    h = _leaky(linear(h, 1))
    cp_sq.wait()                                     # all remaining 128x128 weights
    for i in range(2, 7):
        h = _leaky(linear(h, i))
    h = jnp.tanh(linear(h, 7))

    # ---------------- decoder ----------------
    # block(hidden, 70, normalize=False): Linear + LeakyReLU
    h = _leaky(linear(h, 8))
    # blocks 1..6: Linear + BatchNorm1d(eps=0.8, training-mode batch stats) + LeakyReLU
    for j in range(1, 7):
        i = 8 + j
        h = linear(h, i)
        dout_pad = PADDED_DIMS[i][1]
        mean = jnp.mean(h, axis=0, keepdims=True)
        var = jnp.mean((h - mean) ** 2, axis=0, keepdims=True)     # biased variance
        h = (h - mean) * jax.lax.rsqrt(var + BN_EPS)
        h = h * g_ref[j - 1, :, :dout_pad] + beta_ref[j - 1, :, :dout_pad]
        h = _leaky(h)
    # final Linear(130, input_dim) + Tanh
    h = jnp.tanh(linear(h, 15))

    out_ref[...] = h


@jax.jit
def autoencoder_forward(x, w_sq, w_wide, w_tall, b_pad, g_pad, beta_pad):
    x_pad = jnp.zeros((B, 128), jnp.float32).at[:, :INPUT_DIM].set(x)
    out_pad = pl.pallas_call(
        autoencoder_kernel,
        out_shape=jax.ShapeDtypeStruct((B, 128), jnp.float32),
        grid=(1,),
        in_specs=[
            pl.BlockSpec((B, 128), lambda i: (0, 0)),
            pl.BlockSpec((N_LAYERS, 1, BIAS_P), lambda i: (0, 0, 0)),
            pl.BlockSpec((N_BN, 1, BIAS_P), lambda i: (0, 0, 0)),
            pl.BlockSpec((N_BN, 1, BIAS_P), lambda i: (0, 0, 0)),
            pl.BlockSpec(memory_space=pl.ANY),       # w_sq   stays in HBM, manual DMA
            pl.BlockSpec(memory_space=pl.ANY),       # w_wide
            pl.BlockSpec(memory_space=pl.ANY),       # w_tall
        ],
        out_specs=pl.BlockSpec((B, 128), lambda i: (0, 0)),
        scratch_shapes=[
            pltpu.VMEM((N_SQ, 128, 128), jnp.float32),
            pltpu.VMEM((N_WIDE, 128, 256), jnp.float32),
            pltpu.VMEM((N_TALL, 256, 128), jnp.float32),
            pltpu.SemaphoreType.DMA((3,)),
        ],
        compiler_params=pltpu.CompilerParams(dimension_semantics=("arbitrary",)),
    )(x_pad, b_pad, g_pad, beta_pad, w_sq, w_wide, w_tall)
    return out_pad[:, :INPUT_DIM]


def init_params(key):
    """Deterministic init mirroring nn.Linear's U(-1/sqrt(in), 1/sqrt(in))."""
    Ws, bs = [], []
    for (din, dout) in LAYER_DIMS:
        key, kw, kb = jax.random.split(key, 3)
        bound = 1.0 / (din ** 0.5)
        Ws.append(jax.random.uniform(kw, (din, dout), jnp.float32, -bound, bound))
        bs.append(jax.random.uniform(kb, (dout,), jnp.float32, -bound, bound))
    gammas = [jnp.ones((d,), jnp.float32) for d in DEC_DIMS[2:8]]
    betas = [jnp.zeros((d,), jnp.float32) for d in DEC_DIMS[2:8]]
    return Ws, bs, gammas, betas


def pad_params(Ws, bs, gammas, betas):
    """Pack weights into per-shape stacks padded to 128-multiples; pad biases/BN params."""
    w_sq = np.zeros((N_SQ, 128, 128), np.float32)
    w_wide = np.zeros((N_WIDE, 128, 256), np.float32)
    w_tall = np.zeros((N_TALL, 256, 128), np.float32)
    b_pad = np.zeros((N_LAYERS, 1, BIAS_P), np.float32)
    for i, ((din, dout), W, b) in enumerate(zip(LAYER_DIMS, Ws, bs)):
        Wnp = np.asarray(W)
        if i in SQ_IDX:
            w_sq[SQ_IDX[i], :din, :dout] = Wnp
        elif i in WIDE_IDX:
            w_wide[WIDE_IDX[i], :din, :dout] = Wnp
        else:
            w_tall[TALL_IDX[i], :din, :dout] = Wnp
        b_pad[i, 0, :dout] = np.asarray(b)
    g_pad = np.zeros((N_BN, 1, BIAS_P), np.float32)
    beta_pad = np.zeros((N_BN, 1, BIAS_P), np.float32)
    for j, (g, bt) in enumerate(zip(gammas, betas)):
        g_pad[j, 0, :g.shape[0]] = np.asarray(g)
        beta_pad[j, 0, :bt.shape[0]] = np.asarray(bt)
    return (jnp.asarray(w_sq), jnp.asarray(w_wide), jnp.asarray(w_tall),
            jnp.asarray(b_pad), jnp.asarray(g_pad), jnp.asarray(beta_pad))


def reference_forward(x, Ws, bs, gammas, betas):
    """Pure-JAX reference of the PyTorch forward (training-mode BN)."""
    h = x
    for i in range(8):
        h = h @ Ws[i] + bs[i]
        h = jnp.tanh(h) if i == 7 else jnp.where(h > 0, h, NEG_SLOPE * h)
    for j in range(8):
        i = 8 + j
        h = h @ Ws[i] + bs[i]
        if j == 0:
            h = jnp.where(h > 0, h, NEG_SLOPE * h)
        elif j < 7:
            mean = h.mean(axis=0, keepdims=True)
            var = ((h - mean) ** 2).mean(axis=0, keepdims=True)
            h = (h - mean) / jnp.sqrt(var + BN_EPS) * gammas[j - 1] + betas[j - 1]
            h = jnp.where(h > 0, h, NEG_SLOPE * h)
        else:
            h = jnp.tanh(h)
    return h


if __name__ == "__main__":
    key = jax.random.PRNGKey(0)
    key, kx, kp = jax.random.split(key, 3)

    x = jax.random.normal(kx, (B, INPUT_DIM), jnp.float32)
    Ws, bs, gammas, betas = init_params(kp)
    w_sq, w_wide, w_tall, b_pad, g_pad, beta_pad = pad_params(Ws, bs, gammas, betas)

    out = autoencoder_forward(x, w_sq, w_wide, w_tall, b_pad, g_pad, beta_pad)
    out = jax.block_until_ready(out)

    ref = reference_forward(x, Ws, bs, gammas, betas)
    assert out.shape == (B, INPUT_DIM)
    np.testing.assert_allclose(np.asarray(out), np.asarray(ref), rtol=1e-3, atol=5e-3)

    print("KERNEL_OK")
</pallas_src>

<mosaic_0001>
module attributes {stable_mosaic.version = 11 : i64} {
  func.func @autoencoder_kernel(%arg0: i32, %arg1: memref<8x128xf32, #tpu.memory_space<vmem>>, %arg2: memref<16x1x256xf32, #tpu.memory_space<vmem>>, %arg3: memref<6x1x256xf32, #tpu.memory_space<vmem>>, %arg4: memref<6x1x256xf32, #tpu.memory_space<vmem>>, %arg5: memref<12x128x128xf32, #tpu.memory_space<any>>, %arg6: memref<2x128x256xf32, #tpu.memory_space<any>>, %arg7: memref<2x256x128xf32, #tpu.memory_space<any>>, %arg8: memref<8x128xf32, #tpu.memory_space<vmem>>, %arg9: memref<12x128x128xf32, #tpu.memory_space<vmem>>, %arg10: memref<2x128x256xf32, #tpu.memory_space<vmem>>, %arg11: memref<2x256x128xf32, #tpu.memory_space<vmem>>, %arg12: memref<3x!tpu.dma_semaphore, #tpu.memory_space<semaphore_mem>>) attributes {dimension_semantics = [#tpu.dimension_semantics<arbitrary>], iteration_bounds = array<i64: 1>, scalar_prefetch = 0 : i64, scratch_operands = 4 : i64, tpu.core_type = #tpu.core_type<tc>, window_params = [{pipeline_mode = #tpu.pipeline_mode<synchronous>, transform_indices = @transform_0, window_bounds = array<i64: 8, 128>}, {pipeline_mode = #tpu.pipeline_mode<synchronous>, transform_indices = @transform_1, window_bounds = array<i64: 16, 1, 256>}, {pipeline_mode = #tpu.pipeline_mode<synchronous>, transform_indices = @transform_2, window_bounds = array<i64: 6, 1, 256>}, {pipeline_mode = #tpu.pipeline_mode<synchronous>, transform_indices = @transform_3, window_bounds = array<i64: 6, 1, 256>}, {}, {}, {}, {pipeline_mode = #tpu.pipeline_mode<synchronous>, transform_indices = @transform_7, window_bounds = array<i64: 8, 128>}]} {
    %c0_i32 = arith.constant 0 : i32
    %0 = tpu.memref_slice %arg12[%c0_i32] : memref<3x!tpu.dma_semaphore, #tpu.memory_space<semaphore_mem>> -> memref<1x!tpu.dma_semaphore, #tpu.memory_space<semaphore_mem>>
    %1 = tpu.memref_squeeze %0 : memref<1x!tpu.dma_semaphore, #tpu.memory_space<semaphore_mem>> -> memref<!tpu.dma_semaphore, #tpu.memory_space<semaphore_mem>>
    tpu.enqueue_dma source(%arg6 : memref<2x128x256xf32, #tpu.memory_space<any>>) target(%arg10 : memref<2x128x256xf32, #tpu.memory_space<vmem>>) target_semaphore(%1 : memref<!tpu.dma_semaphore, #tpu.memory_space<semaphore_mem>>)
    %c1_i32 = arith.constant 1 : i32
    %2 = tpu.memref_slice %arg12[%c1_i32] : memref<3x!tpu.dma_semaphore, #tpu.memory_space<semaphore_mem>> -> memref<1x!tpu.dma_semaphore, #tpu.memory_space<semaphore_mem>>
    %3 = tpu.memref_squeeze %2 : memref<1x!tpu.dma_semaphore, #tpu.memory_space<semaphore_mem>> -> memref<!tpu.dma_semaphore, #tpu.memory_space<semaphore_mem>>
    tpu.enqueue_dma source(%arg7 : memref<2x256x128xf32, #tpu.memory_space<any>>) target(%arg11 : memref<2x256x128xf32, #tpu.memory_space<vmem>>) target_semaphore(%3 : memref<!tpu.dma_semaphore, #tpu.memory_space<semaphore_mem>>)
    %c2_i32 = arith.constant 2 : i32
    %4 = tpu.memref_slice %arg12[%c2_i32] : memref<3x!tpu.dma_semaphore, #tpu.memory_space<semaphore_mem>> -> memref<1x!tpu.dma_semaphore, #tpu.memory_space<semaphore_mem>>
    %5 = tpu.memref_squeeze %4 : memref<1x!tpu.dma_semaphore, #tpu.memory_space<semaphore_mem>> -> memref<!tpu.dma_semaphore, #tpu.memory_space<semaphore_mem>>
    tpu.enqueue_dma source(%arg5 : memref<12x128x128xf32, #tpu.memory_space<any>>) target(%arg9 : memref<12x128x128xf32, #tpu.memory_space<vmem>>) target_semaphore(%5 : memref<!tpu.dma_semaphore, #tpu.memory_space<semaphore_mem>>)
    %c0 = arith.constant 0 : index
    %c0_0 = arith.constant 0 : index
    %6 = vector.load %arg1[%c0, %c0_0] : memref<8x128xf32, #tpu.memory_space<vmem>>, vector<8x128xf32>
    %c0_i32_1 = arith.constant 0 : i32
    %7 = tpu.memref_slice %arg12[%c0_i32_1] : memref<3x!tpu.dma_semaphore, #tpu.memory_space<semaphore_mem>> -> memref<1x!tpu.dma_semaphore, #tpu.memory_space<semaphore_mem>>
    %8 = tpu.memref_squeeze %7 : memref<1x!tpu.dma_semaphore, #tpu.memory_space<semaphore_mem>> -> memref<!tpu.dma_semaphore, #tpu.memory_space<semaphore_mem>>
    tpu.wait_dma2 semaphore(%8 : memref<!tpu.dma_semaphore, #tpu.memory_space<semaphore_mem>>) src(%arg6 : memref<2x128x256xf32, #tpu.memory_space<any>>) dst(%arg10 : memref<2x128x256xf32, #tpu.memory_space<vmem>>)
    %c0_2 = arith.constant 0 : index
    %c0_3 = arith.constant 0 : index
    %c0_4 = arith.constant 0 : index
    %9 = vector.load %arg10[%c0_2, %c0_3, %c0_4] : memref<2x128x256xf32, #tpu.memory_space<vmem>>, vector<1x128x256xf32>
    %10 = vector.shape_cast %9 : vector<1x128x256xf32> to vector<128x256xf32>
    %cst = arith.constant dense<0.000000e+00> : vector<8x256xf32>
    %11 = tpu.matmul %6, %10, %cst {dimension_numbers = #tpu.dot_dimension_numbers<[1], [0], [0], [1], [0, 0, 1, 1], [], []>} : vector<8x128xf32>, vector<128x256xf32>, vector<8x256xf32> -> vector<8x256xf32>
    %c0_5 = arith.constant 0 : index
    %c0_6 = arith.constant 0 : index
    %c0_7 = arith.constant 0 : index
    %12 = vector.load %arg2[%c0_5, %c0_6, %c0_7] : memref<16x1x256xf32, #tpu.memory_space<vmem>>, vector<1x1x256xf32>
    %13 = vector.shape_cast %12 : vector<1x1x256xf32> to vector<1x256xf32>
    %14 = vector.broadcast %13 : vector<1x256xf32> to vector<8x256xf32>
    %15 = arith.addf %11, %14 : vector<8x256xf32>
    %cst_8 = arith.constant 0.000000e+00 : f32
    %16 = vector.broadcast %cst_8 : f32 to vector<8x256xf32>
    %17 = arith.cmpf ogt, %15, %16 : vector<8x256xf32>
    %cst_9 = arith.constant 2.000000e-01 : f32
    %18 = vector.broadcast %cst_9 : f32 to vector<8x256xf32>
    %19 = arith.mulf %18, %15 : vector<8x256xf32>
    %20 = arith.select %17, %15, %19 : vector<8x256xi1>, vector<8x256xf32>
    %c1_i32_10 = arith.constant 1 : i32
    %21 = tpu.memref_slice %arg12[%c1_i32_10] : memref<3x!tpu.dma_semaphore, #tpu.memory_space<semaphore_mem>> -> memref<1x!tpu.dma_semaphore, #tpu.memory_space<semaphore_mem>>
    %22 = tpu.memref_squeeze %21 : memref<1x!tpu.dma_semaphore, #tpu.memory_space<semaphore_mem>> -> memref<!tpu.dma_semaphore, #tpu.memory_space<semaphore_mem>>
    tpu.wait_dma2 semaphore(%22 : memref<!tpu.dma_semaphore, #tpu.memory_space<semaphore_mem>>) src(%arg7 : memref<2x256x128xf32, #tpu.memory_space<any>>) dst(%arg11 : memref<2x256x128xf32, #tpu.memory_space<vmem>>)
    %c0_11 = arith.constant 0 : index
    %c0_12 = arith.constant 0 : index
    %c0_13 = arith.constant 0 : index
    %23 = vector.load %arg11[%c0_11, %c0_12, %c0_13] : memref<2x256x128xf32, #tpu.memory_space<vmem>>, vector<1x256x128xf32>
    %24 = vector.shape_cast %23 : vector<1x256x128xf32> to vector<256x128xf32>
    %cst_14 = arith.constant dense<0.000000e+00> : vector<8x128xf32>
    %25 = tpu.matmul %20, %24, %cst_14 {dimension_numbers = #tpu.dot_dimension_numbers<[1], [0], [0], [1], [0, 0, 1, 1], [], []>} : vector<8x256xf32>, vector<256x128xf32>, vector<8x128xf32> -> vector<8x128xf32>
    %c1 = arith.constant 1 : index
    %c0_15 = arith.constant 0 : index
    %c0_16 = arith.constant 0 : index
    %26 = vector.load %arg2[%c1, %c0_15, %c0_16] : memref<16x1x256xf32, #tpu.memory_space<vmem>>, vector<1x1x128xf32>
    %27 = vector.shape_cast %26 : vector<1x1x128xf32> to vector<1x128xf32>
    %28 = vector.broadcast %27 : vector<1x128xf32> to vector<8x128xf32>
    %29 = arith.addf %25, %28 : vector<8x128xf32>
    %cst_17 = arith.constant 0.000000e+00 : f32
    %30 = vector.broadcast %cst_17 : f32 to vector<8x128xf32>
    %31 = arith.cmpf ogt, %29, %30 : vector<8x128xf32>
    %cst_18 = arith.constant 2.000000e-01 : f32
    %32 = vector.broadcast %cst_18 : f32 to vector<8x128xf32>
    %33 = arith.mulf %32, %29 : vector<8x128xf32>
    %34 = arith.select %31, %29, %33 : vector<8x128xi1>, vector<8x128xf32>
    %c2_i32_19 = arith.constant 2 : i32
    %35 = tpu.memref_slice %arg12[%c2_i32_19] : memref<3x!tpu.dma_semaphore, #tpu.memory_space<semaphore_mem>> -> memref<1x!tpu.dma_semaphore, #tpu.memory_space<semaphore_mem>>
    %36 = tpu.memref_squeeze %35 : memref<1x!tpu.dma_semaphore, #tpu.memory_space<semaphore_mem>> -> memref<!tpu.dma_semaphore, #tpu.memory_space<semaphore_mem>>
    tpu.wait_dma2 semaphore(%36 : memref<!tpu.dma_semaphore, #tpu.memory_space<semaphore_mem>>) src(%arg5 : memref<12x128x128xf32, #tpu.memory_space<any>>) dst(%arg9 : memref<12x128x128xf32, #tpu.memory_space<vmem>>)
    %c0_20 = arith.constant 0 : index
    %c0_21 = arith.constant 0 : index
    %c0_22 = arith.constant 0 : index
    %37 = vector.load %arg9[%c0_20, %c0_21, %c0_22] : memref<12x128x128xf32, #tpu.memory_space<vmem>>, vector<1x128x128xf32>
    %38 = vector.shape_cast %37 : vector<1x128x128xf32> to vector<128x128xf32>
    %cst_23 = arith.constant dense<0.000000e+00> : vector<8x128xf32>
    %39 = tpu.matmul %34, %38, %cst_23 {dimension_numbers = #tpu.dot_dimension_numbers<[1], [0], [0], [1], [0, 0, 1, 1], [], []>} : vector<8x128xf32>, vector<128x128xf32>, vector<8x128xf32> -> vector<8x128xf32>
    %c2 = arith.constant 2 : index
    %c0_24 = arith.constant 0 : index
    %c0_25 = arith.constant 0 : index
    %40 = vector.load %arg2[%c2, %c0_24, %c0_25] : memref<16x1x256xf32, #tpu.memory_space<vmem>>, vector<1x1x128xf32>
    %41 = vector.shape_cast %40 : vector<1x1x128xf32> to vector<1x128xf32>
    %42 = vector.broadcast %41 : vector<1x128xf32> to vector<8x128xf32>
    %43 = arith.addf %39, %42 : vector<8x128xf32>
    %cst_26 = arith.constant 0.000000e+00 : f32
    %44 = vector.broadcast %cst_26 : f32 to vector<8x128xf32>
    %45 = arith.cmpf ogt, %43, %44 : vector<8x128xf32>
    %cst_27 = arith.constant 2.000000e-01 : f32
    %46 = vector.broadcast %cst_27 : f32 to vector<8x128xf32>
    %47 = arith.mulf %46, %43 : vector<8x128xf32>
    %48 = arith.select %45, %43, %47 : vector<8x128xi1>, vector<8x128xf32>
    %c1_28 = arith.constant 1 : index
    %c0_29 = arith.constant 0 : index
    %c0_30 = arith.constant 0 : index
    %49 = vector.load %arg9[%c1_28, %c0_29, %c0_30] : memref<12x128x128xf32, #tpu.memory_space<vmem>>, vector<1x128x128xf32>
    %50 = vector.shape_cast %49 : vector<1x128x128xf32> to vector<128x128xf32>
    %cst_31 = arith.constant dense<0.000000e+00> : vector<8x128xf32>
    %51 = tpu.matmul %48, %50, %cst_31 {dimension_numbers = #tpu.dot_dimension_numbers<[1], [0], [0], [1], [0, 0, 1, 1], [], []>} : vector<8x128xf32>, vector<128x128xf32>, vector<8x128xf32> -> vector<8x128xf32>
    %c3 = arith.constant 3 : index
    %c0_32 = arith.constant 0 : index
    %c0_33 = arith.constant 0 : index
    %52 = vector.load %arg2[%c3, %c0_32, %c0_33] : memref<16x1x256xf32, #tpu.memory_space<vmem>>, vector<1x1x128xf32>
    %53 = vector.shape_cast %52 : vector<1x1x128xf32> to vector<1x128xf32>
    %54 = vector.broadcast %53 : vector<1x128xf32> to vector<8x128xf32>
    %55 = arith.addf %51, %54 : vector<8x128xf32>
    %cst_34 = arith.constant 0.000000e+00 : f32
    %56 = vector.broadcast %cst_34 : f32 to vector<8x128xf32>
    %57 = arith.cmpf ogt, %55, %56 : vector<8x128xf32>
    %cst_35 = arith.constant 2.000000e-01 : f32
    %58 = vector.broadcast %cst_35 : f32 to vector<8x128xf32>
    %59 = arith.mulf %58, %55 : vector<8x128xf32>
    %60 = arith.select %57, %55, %59 : vector<8x128xi1>, vector<8x128xf32>
    %c2_36 = arith.constant 2 : index
    %c0_37 = arith.constant 0 : index
    %c0_38 = arith.constant 0 : index
    %61 = vector.load %arg9[%c2_36, %c0_37, %c0_38] : memref<12x128x128xf32, #tpu.memory_space<vmem>>, vector<1x128x128xf32>
    %62 = vector.shape_cast %61 : vector<1x128x128xf32> to vector<128x128xf32>
    %cst_39 = arith.constant dense<0.000000e+00> : vector<8x128xf32>
    %63 = tpu.matmul %60, %62, %cst_39 {dimension_numbers = #tpu.dot_dimension_numbers<[1], [0], [0], [1], [0, 0, 1, 1], [], []>} : vector<8x128xf32>, vector<128x128xf32>, vector<8x128xf32> -> vector<8x128xf32>
    %c4 = arith.constant 4 : index
    %c0_40 = arith.constant 0 : index
    %c0_41 = arith.constant 0 : index
    %64 = vector.load %arg2[%c4, %c0_40, %c0_41] : memref<16x1x256xf32, #tpu.memory_space<vmem>>, vector<1x1x128xf32>
    %65 = vector.shape_cast %64 : vector<1x1x128xf32> to vector<1x128xf32>
    %66 = vector.broadcast %65 : vector<1x128xf32> to vector<8x128xf32>
    %67 = arith.addf %63, %66 : vector<8x128xf32>
    %cst_42 = arith.constant 0.000000e+00 : f32
    %68 = vector.broadcast %cst_42 : f32 to vector<8x128xf32>
    %69 = arith.cmpf ogt, %67, %68 : vector<8x128xf32>
    %cst_43 = arith.constant 2.000000e-01 : f32
    %70 = vector.broadcast %cst_43 : f32 to vector<8x128xf32>
    %71 = arith.mulf %70, %67 : vector<8x128xf32>
    %72 = arith.select %69, %67, %71 : vector<8x128xi1>, vector<8x128xf32>
    %c3_44 = arith.constant 3 : index
    %c0_45 = arith.constant 0 : index
    %c0_46 = arith.constant 0 : index
    %73 = vector.load %arg9[%c3_44, %c0_45, %c0_46] : memref<12x128x128xf32, #tpu.memory_space<vmem>>, vector<1x128x128xf32>
    %74 = vector.shape_cast %73 : vector<1x128x128xf32> to vector<128x128xf32>
    %cst_47 = arith.constant dense<0.000000e+00> : vector<8x128xf32>
    %75 = tpu.matmul %72, %74, %cst_47 {dimension_numbers = #tpu.dot_dimension_numbers<[1], [0], [0], [1], [0, 0, 1, 1], [], []>} : vector<8x128xf32>, vector<128x128xf32>, vector<8x128xf32> -> vector<8x128xf32>
    %c5 = arith.constant 5 : index
    %c0_48 = arith.constant 0 : index
    %c0_49 = arith.constant 0 : index
    %76 = vector.load %arg2[%c5, %c0_48, %c0_49] : memref<16x1x256xf32, #tpu.memory_space<vmem>>, vector<1x1x128xf32>
    %77 = vector.shape_cast %76 : vector<1x1x128xf32> to vector<1x128xf32>
    %78 = vector.broadcast %77 : vector<1x128xf32> to vector<8x128xf32>
    %79 = arith.addf %75, %78 : vector<8x128xf32>
    %cst_50 = arith.constant 0.000000e+00 : f32
    %80 = vector.broadcast %cst_50 : f32 to vector<8x128xf32>
    %81 = arith.cmpf ogt, %79, %80 : vector<8x128xf32>
    %cst_51 = arith.constant 2.000000e-01 : f32
    %82 = vector.broadcast %cst_51 : f32 to vector<8x128xf32>
    %83 = arith.mulf %82, %79 : vector<8x128xf32>
    %84 = arith.select %81, %79, %83 : vector<8x128xi1>, vector<8x128xf32>
    %c4_52 = arith.constant 4 : index
    %c0_53 = arith.constant 0 : index
    %c0_54 = arith.constant 0 : index
    %85 = vector.load %arg9[%c4_52, %c0_53, %c0_54] : memref<12x128x128xf32, #tpu.memory_space<vmem>>, vector<1x128x128xf32>
    %86 = vector.shape_cast %85 : vector<1x128x128xf32> to vector<128x128xf32>
    %cst_55 = arith.constant dense<0.000000e+00> : vector<8x128xf32>
    %87 = tpu.matmul %84, %86, %cst_55 {dimension_numbers = #tpu.dot_dimension_numbers<[1], [0], [0], [1], [0, 0, 1, 1], [], []>} : vector<8x128xf32>, vector<128x128xf32>, vector<8x128xf32> -> vector<8x128xf32>
    %c6 = arith.constant 6 : index
    %c0_56 = arith.constant 0 : index
    %c0_57 = arith.constant 0 : index
    %88 = vector.load %arg2[%c6, %c0_56, %c0_57] : memref<16x1x256xf32, #tpu.memory_space<vmem>>, vector<1x1x128xf32>
    %89 = vector.shape_cast %88 : vector<1x1x128xf32> to vector<1x128xf32>
    %90 = vector.broadcast %89 : vector<1x128xf32> to vector<8x128xf32>
    %91 = arith.addf %87, %90 : vector<8x128xf32>
    %cst_58 = arith.constant 0.000000e+00 : f32
    %92 = vector.broadcast %cst_58 : f32 to vector<8x128xf32>
    %93 = arith.cmpf ogt, %91, %92 : vector<8x128xf32>
    %cst_59 = arith.constant 2.000000e-01 : f32
    %94 = vector.broadcast %cst_59 : f32 to vector<8x128xf32>
    %95 = arith.mulf %94, %91 : vector<8x128xf32>
    %96 = arith.select %93, %91, %95 : vector<8x128xi1>, vector<8x128xf32>
    %c5_60 = arith.constant 5 : index
    %c0_61 = arith.constant 0 : index
    %c0_62 = arith.constant 0 : index
    %97 = vector.load %arg9[%c5_60, %c0_61, %c0_62] : memref<12x128x128xf32, #tpu.memory_space<vmem>>, vector<1x128x128xf32>
    %98 = vector.shape_cast %97 : vector<1x128x128xf32> to vector<128x128xf32>
    %cst_63 = arith.constant dense<0.000000e+00> : vector<8x128xf32>
    %99 = tpu.matmul %96, %98, %cst_63 {dimension_numbers = #tpu.dot_dimension_numbers<[1], [0], [0], [1], [0, 0, 1, 1], [], []>} : vector<8x128xf32>, vector<128x128xf32>, vector<8x128xf32> -> vector<8x128xf32>
    %c7 = arith.constant 7 : index
    %c0_64 = arith.constant 0 : index
    %c0_65 = arith.constant 0 : index
    %100 = vector.load %arg2[%c7, %c0_64, %c0_65] : memref<16x1x256xf32, #tpu.memory_space<vmem>>, vector<1x1x128xf32>
    %101 = vector.shape_cast %100 : vector<1x1x128xf32> to vector<1x128xf32>
    %102 = vector.broadcast %101 : vector<1x128xf32> to vector<8x128xf32>
    %103 = arith.addf %99, %102 : vector<8x128xf32>
    %104 = math.tanh %103 : vector<8x128xf32>
    %c6_66 = arith.constant 6 : index
    %c0_67 = arith.constant 0 : index
    %c0_68 = arith.constant 0 : index
    %105 = vector.load %arg9[%c6_66, %c0_67, %c0_68] : memref<12x128x128xf32, #tpu.memory_space<vmem>>, vector<1x128x128xf32>
    %106 = vector.shape_cast %105 : vector<1x128x128xf32> to vector<128x128xf32>
    %cst_69 = arith.constant dense<0.000000e+00> : vector<8x128xf32>
    %107 = tpu.matmul %104, %106, %cst_69 {dimension_numbers = #tpu.dot_dimension_numbers<[1], [0], [0], [1], [0, 0, 1, 1], [], []>} : vector<8x128xf32>, vector<128x128xf32>, vector<8x128xf32> -> vector<8x128xf32>
    %c8 = arith.constant 8 : index
    %c0_70 = arith.constant 0 : index
    %c0_71 = arith.constant 0 : index
    %108 = vector.load %arg2[%c8, %c0_70, %c0_71] : memref<16x1x256xf32, #tpu.memory_space<vmem>>, vector<1x1x128xf32>
    %109 = vector.shape_cast %108 : vector<1x1x128xf32> to vector<1x128xf32>
    %110 = vector.broadcast %109 : vector<1x128xf32> to vector<8x128xf32>
    %111 = arith.addf %107, %110 : vector<8x128xf32>
    %cst_72 = arith.constant 0.000000e+00 : f32
    %112 = vector.broadcast %cst_72 : f32 to vector<8x128xf32>
    %113 = arith.cmpf ogt, %111, %112 : vector<8x128xf32>
    %cst_73 = arith.constant 2.000000e-01 : f32
    %114 = vector.broadcast %cst_73 : f32 to vector<8x128xf32>
    %115 = arith.mulf %114, %111 : vector<8x128xf32>
    %116 = arith.select %113, %111, %115 : vector<8x128xi1>, vector<8x128xf32>
    %c7_74 = arith.constant 7 : index
    %c0_75 = arith.constant 0 : index
    %c0_76 = arith.constant 0 : index
    %117 = vector.load %arg9[%c7_74, %c0_75, %c0_76] : memref<12x128x128xf32, #tpu.memory_space<vmem>>, vector<1x128x128xf32>
    %118 = vector.shape_cast %117 : vector<1x128x128xf32> to vector<128x128xf32>
    %cst_77 = arith.constant dense<0.000000e+00> : vector<8x128xf32>
    %119 = tpu.matmul %116, %118, %cst_77 {dimension_numbers = #tpu.dot_dimension_numbers<[1], [0], [0], [1], [0, 0, 1, 1], [], []>} : vector<8x128xf32>, vector<128x128xf32>, vector<8x128xf32> -> vector<8x128xf32>
    %c9 = arith.constant 9 : index
    %c0_78 = arith.constant 0 : index
    %c0_79 = arith.constant 0 : index
    %120 = vector.load %arg2[%c9, %c0_78, %c0_79] : memref<16x1x256xf32, #tpu.memory_space<vmem>>, vector<1x1x128xf32>
    %121 = vector.shape_cast %120 : vector<1x1x128xf32> to vector<1x128xf32>
    %122 = vector.broadcast %121 : vector<1x128xf32> to vector<8x128xf32>
    %123 = arith.addf %119, %122 : vector<8x128xf32>
    %cst_80 = arith.constant dense<0.000000e+00> : vector<128xf32>
    %124 = vector.multi_reduction <add>, %123, %cst_80 [0] : vector<8x128xf32> to vector<128xf32>
    %125 = vector.shape_cast %124 : vector<128xf32> to vector<1x128xf32>
    %cst_81 = arith.constant 8.000000e+00 : f32
    %126 = vector.broadcast %cst_81 : f32 to vector<1x128xf32>
    %127 = arith.divf %125, %126 : vector<1x128xf32>
    %128 = vector.broadcast %127 : vector<1x128xf32> to vector<8x128xf32>
    %129 = arith.subf %123, %128 : vector<8x128xf32>
    %130 = arith.mulf %129, %129 : vector<8x128xf32>
    %cst_82 = arith.constant dense<0.000000e+00> : vector<128xf32>
    %131 = vector.multi_reduction <add>, %130, %cst_82 [0] : vector<8x128xf32> to vector<128xf32>
    %132 = vector.shape_cast %131 : vector<128xf32> to vector<1x128xf32>
    %cst_83 = arith.constant 8.000000e+00 : f32
    %133 = vector.broadcast %cst_83 : f32 to vector<1x128xf32>
    %134 = arith.divf %132, %133 : vector<1x128xf32>
    %135 = vector.broadcast %127 : vector<1x128xf32> to vector<8x128xf32>
    %136 = arith.subf %123, %135 : vector<8x128xf32>
    %cst_84 = arith.constant 8.000000e-01 : f32
    %137 = vector.broadcast %cst_84 : f32 to vector<1x128xf32>
    %138 = arith.addf %134, %137 : vector<1x128xf32>
    %139 = math.rsqrt %138 : vector<1x128xf32>
    %140 = vector.broadcast %139 : vector<1x128xf32> to vector<8x128xf32>
    %141 = arith.mulf %136, %140 : vector<8x128xf32>
    %c0_85 = arith.constant 0 : index
    %c0_86 = arith.constant 0 : index
    %c0_87 = arith.constant 0 : index
    %142 = vector.load %arg3[%c0_85, %c0_86, %c0_87] : memref<6x1x256xf32, #tpu.memory_space<vmem>>, vector<1x1x128xf32>
    %143 = vector.shape_cast %142 : vector<1x1x128xf32> to vector<1x128xf32>
    %144 = vector.broadcast %143 : vector<1x128xf32> to vector<8x128xf32>
    %145 = arith.mulf %141, %144 : vector<8x128xf32>
    %c0_88 = arith.constant 0 : index
    %c0_89 = arith.constant 0 : index
    %c0_90 = arith.constant 0 : index
    %146 = vector.load %arg4[%c0_88, %c0_89, %c0_90] : memref<6x1x256xf32, #tpu.memory_space<vmem>>, vector<1x1x128xf32>
    %147 = vector.shape_cast %146 : vector<1x1x128xf32> to vector<1x128xf32>
    %148 = vector.broadcast %147 : vector<1x128xf32> to vector<8x128xf32>
    %149 = arith.addf %145, %148 : vector<8x128xf32>
    %cst_91 = arith.constant 0.000000e+00 : f32
    %150 = vector.broadcast %cst_91 : f32 to vector<8x128xf32>
    %151 = arith.cmpf ogt, %149, %150 : vector<8x128xf32>
    %cst_92 = arith.constant 2.000000e-01 : f32
    %152 = vector.broadcast %cst_92 : f32 to vector<8x128xf32>
    %153 = arith.mulf %152, %149 : vector<8x128xf32>
    %154 = arith.select %151, %149, %153 : vector<8x128xi1>, vector<8x128xf32>
    %c8_93 = arith.constant 8 : index
    %c0_94 = arith.constant 0 : index
    %c0_95 = arith.constant 0 : index
    %155 = vector.load %arg9[%c8_93, %c0_94, %c0_95] : memref<12x128x128xf32, #tpu.memory_space<vmem>>, vector<1x128x128xf32>
    %156 = vector.shape_cast %155 : vector<1x128x128xf32> to vector<128x128xf32>
    %cst_96 = arith.constant dense<0.000000e+00> : vector<8x128xf32>
    %157 = tpu.matmul %154, %156, %cst_96 {dimension_numbers = #tpu.dot_dimension_numbers<[1], [0], [0], [1], [0, 0, 1, 1], [], []>} : vector<8x128xf32>, vector<128x128xf32>, vector<8x128xf32> -> vector<8x128xf32>
    %c10 = arith.constant 10 : index
    %c0_97 = arith.constant 0 : index
    %c0_98 = arith.constant 0 : index
    %158 = vector.load %arg2[%c10, %c0_97, %c0_98] : memref<16x1x256xf32, #tpu.memory_space<vmem>>, vector<1x1x128xf32>
    %159 = vector.shape_cast %158 : vector<1x1x128xf32> to vector<1x128xf32>
    %160 = vector.broadcast %159 : vector<1x128xf32> to vector<8x128xf32>
    %161 = arith.addf %157, %160 : vector<8x128xf32>
    %cst_99 = arith.constant dense<0.000000e+00> : vector<128xf32>
    %162 = vector.multi_reduction <add>, %161, %cst_99 [0] : vector<8x128xf32> to vector<128xf32>
    %163 = vector.shape_cast %162 : vector<128xf32> to vector<1x128xf32>
    %cst_100 = arith.constant 8.000000e+00 : f32
    %164 = vector.broadcast %cst_100 : f32 to vector<1x128xf32>
    %165 = arith.divf %163, %164 : vector<1x128xf32>
    %166 = vector.broadcast %165 : vector<1x128xf32> to vector<8x128xf32>
    %167 = arith.subf %161, %166 : vector<8x128xf32>
    %168 = arith.mulf %167, %167 : vector<8x128xf32>
    %cst_101 = arith.constant dense<0.000000e+00> : vector<128xf32>
    %169 = vector.multi_reduction <add>, %168, %cst_101 [0] : vector<8x128xf32> to vector<128xf32>
    %170 = vector.shape_cast %169 : vector<128xf32> to vector<1x128xf32>
    %cst_102 = arith.constant 8.000000e+00 : f32
    %171 = vector.broadcast %cst_102 : f32 to vector<1x128xf32>
    %172 = arith.divf %170, %171 : vector<1x128xf32>
    %173 = vector.broadcast %165 : vector<1x128xf32> to vector<8x128xf32>
    %174 = arith.subf %161, %173 : vector<8x128xf32>
    %cst_103 = arith.constant 8.000000e-01 : f32
    %175 = vector.broadcast %cst_103 : f32 to vector<1x128xf32>
    %176 = arith.addf %172, %175 : vector<1x128xf32>
    %177 = math.rsqrt %176 : vector<1x128xf32>
    %178 = vector.broadcast %177 : vector<1x128xf32> to vector<8x128xf32>
    %179 = arith.mulf %174, %178 : vector<8x128xf32>
    %c1_104 = arith.constant 1 : index
    %c0_105 = arith.constant 0 : index
    %c0_106 = arith.constant 0 : index
    %180 = vector.load %arg3[%c1_104, %c0_105, %c0_106] : memref<6x1x256xf32, #tpu.memory_space<vmem>>, vector<1x1x128xf32>
    %181 = vector.shape_cast %180 : vector<1x1x128xf32> to vector<1x128xf32>
    %182 = vector.broadcast %181 : vector<1x128xf32> to vector<8x128xf32>
    %183 = arith.mulf %179, %182 : vector<8x128xf32>
    %c1_107 = arith.constant 1 : index
    %c0_108 = arith.constant 0 : index
    %c0_109 = arith.constant 0 : index
    %184 = vector.load %arg4[%c1_107, %c0_108, %c0_109] : memref<6x1x256xf32, #tpu.memory_space<vmem>>, vector<1x1x128xf32>
    %185 = vector.shape_cast %184 : vector<1x1x128xf32> to vector<1x128xf32>
    %186 = vector.broadcast %185 : vector<1x128xf32> to vector<8x128xf32>
    %187 = arith.addf %183, %186 : vector<8x128xf32>
    %cst_110 = arith.constant 0.000000e+00 : f32
    %188 = vector.broadcast %cst_110 : f32 to vector<8x128xf32>
    %189 = arith.cmpf ogt, %187, %188 : vector<8x128xf32>
    %cst_111 = arith.constant 2.000000e-01 : f32
    %190 = vector.broadcast %cst_111 : f32 to vector<8x128xf32>
    %191 = arith.mulf %190, %187 : vector<8x128xf32>
    %192 = arith.select %189, %187, %191 : vector<8x128xi1>, vector<8x128xf32>
    %c9_112 = arith.constant 9 : index
    %c0_113 = arith.constant 0 : index
    %c0_114 = arith.constant 0 : index
    %193 = vector.load %arg9[%c9_112, %c0_113, %c0_114] : memref<12x128x128xf32, #tpu.memory_space<vmem>>, vector<1x128x128xf32>
    %194 = vector.shape_cast %193 : vector<1x128x128xf32> to vector<128x128xf32>
    %cst_115 = arith.constant dense<0.000000e+00> : vector<8x128xf32>
    %195 = tpu.matmul %192, %194, %cst_115 {dimension_numbers = #tpu.dot_dimension_numbers<[1], [0], [0], [1], [0, 0, 1, 1], [], []>} : vector<8x128xf32>, vector<128x128xf32>, vector<8x128xf32> -> vector<8x128xf32>
    %c11 = arith.constant 11 : index
    %c0_116 = arith.constant 0 : index
    %c0_117 = arith.constant 0 : index
    %196 = vector.load %arg2[%c11, %c0_116, %c0_117] : memref<16x1x256xf32, #tpu.memory_space<vmem>>, vector<1x1x128xf32>
    %197 = vector.shape_cast %196 : vector<1x1x128xf32> to vector<1x128xf32>
    %198 = vector.broadcast %197 : vector<1x128xf32> to vector<8x128xf32>
    %199 = arith.addf %195, %198 : vector<8x128xf32>
    %cst_118 = arith.constant dense<0.000000e+00> : vector<128xf32>
    %200 = vector.multi_reduction <add>, %199, %cst_118 [0] : vector<8x128xf32> to vector<128xf32>
    %201 = vector.shape_cast %200 : vector<128xf32> to vector<1x128xf32>
    %cst_119 = arith.constant 8.000000e+00 : f32
    %202 = vector.broadcast %cst_119 : f32 to vector<1x128xf32>
    %203 = arith.divf %201, %202 : vector<1x128xf32>
    %204 = vector.broadcast %203 : vector<1x128xf32> to vector<8x128xf32>
    %205 = arith.subf %199, %204 : vector<8x128xf32>
    %206 = arith.mulf %205, %205 : vector<8x128xf32>
    %cst_120 = arith.constant dense<0.000000e+00> : vector<128xf32>
    %207 = vector.multi_reduction <add>, %206, %cst_120 [0] : vector<8x128xf32> to vector<128xf32>
    %208 = vector.shape_cast %207 : vector<128xf32> to vector<1x128xf32>
    %cst_121 = arith.constant 8.000000e+00 : f32
    %209 = vector.broadcast %cst_121 : f32 to vector<1x128xf32>
    %210 = arith.divf %208, %209 : vector<1x128xf32>
    %211 = vector.broadcast %203 : vector<1x128xf32> to vector<8x128xf32>
    %212 = arith.subf %199, %211 : vector<8x128xf32>
    %cst_122 = arith.constant 8.000000e-01 : f32
    %213 = vector.broadcast %cst_122 : f32 to vector<1x128xf32>
    %214 = arith.addf %210, %213 : vector<1x128xf32>
    %215 = math.rsqrt %214 : vector<1x128xf32>
    %216 = vector.broadcast %215 : vector<1x128xf32> to vector<8x128xf32>
    %217 = arith.mulf %212, %216 : vector<8x128xf32>
    %c2_123 = arith.constant 2 : index
    %c0_124 = arith.constant 0 : index
    %c0_125 = arith.constant 0 : index
    %218 = vector.load %arg3[%c2_123, %c0_124, %c0_125] : memref<6x1x256xf32, #tpu.memory_space<vmem>>, vector<1x1x128xf32>
    %219 = vector.shape_cast %218 : vector<1x1x128xf32> to vector<1x128xf32>
    %220 = vector.broadcast %219 : vector<1x128xf32> to vector<8x128xf32>
    %221 = arith.mulf %217, %220 : vector<8x128xf32>
    %c2_126 = arith.constant 2 : index
    %c0_127 = arith.constant 0 : index
    %c0_128 = arith.constant 0 : index
    %222 = vector.load %arg4[%c2_126, %c0_127, %c0_128] : memref<6x1x256xf32, #tpu.memory_space<vmem>>, vector<1x1x128xf32>
    %223 = vector.shape_cast %222 : vector<1x1x128xf32> to vector<1x128xf32>
    %224 = vector.broadcast %223 : vector<1x128xf32> to vector<8x128xf32>
    %225 = arith.addf %221, %224 : vector<8x128xf32>
    %cst_129 = arith.constant 0.000000e+00 : f32
    %226 = vector.broadcast %cst_129 : f32 to vector<8x128xf32>
    %227 = arith.cmpf ogt, %225, %226 : vector<8x128xf32>
    %cst_130 = arith.constant 2.000000e-01 : f32
    %228 = vector.broadcast %cst_130 : f32 to vector<8x128xf32>
    %229 = arith.mulf %228, %225 : vector<8x128xf32>
    %230 = arith.select %227, %225, %229 : vector<8x128xi1>, vector<8x128xf32>
    %c10_131 = arith.constant 10 : index
    %c0_132 = arith.constant 0 : index
    %c0_133 = arith.constant 0 : index
    %231 = vector.load %arg9[%c10_131, %c0_132, %c0_133] : memref<12x128x128xf32, #tpu.memory_space<vmem>>, vector<1x128x128xf32>
    %232 = vector.shape_cast %231 : vector<1x128x128xf32> to vector<128x128xf32>
    %cst_134 = arith.constant dense<0.000000e+00> : vector<8x128xf32>
    %233 = tpu.matmul %230, %232, %cst_134 {dimension_numbers = #tpu.dot_dimension_numbers<[1], [0], [0], [1], [0, 0, 1, 1], [], []>} : vector<8x128xf32>, vector<128x128xf32>, vector<8x128xf32> -> vector<8x128xf32>
    %c12 = arith.constant 12 : index
    %c0_135 = arith.constant 0 : index
    %c0_136 = arith.constant 0 : index
    %234 = vector.load %arg2[%c12, %c0_135, %c0_136] : memref<16x1x256xf32, #tpu.memory_space<vmem>>, vector<1x1x128xf32>
    %235 = vector.shape_cast %234 : vector<1x1x128xf32> to vector<1x128xf32>
    %236 = vector.broadcast %235 : vector<1x128xf32> to vector<8x128xf32>
    %237 = arith.addf %233, %236 : vector<8x128xf32>
    %cst_137 = arith.constant dense<0.000000e+00> : vector<128xf32>
    %238 = vector.multi_reduction <add>, %237, %cst_137 [0] : vector<8x128xf32> to vector<128xf32>
    %239 = vector.shape_cast %238 : vector<128xf32> to vector<1x128xf32>
    %cst_138 = arith.constant 8.000000e+00 : f32
    %240 = vector.broadcast %cst_138 : f32 to vector<1x128xf32>
    %241 = arith.divf %239, %240 : vector<1x128xf32>
    %242 = vector.broadcast %241 : vector<1x128xf32> to vector<8x128xf32>
    %243 = arith.subf %237, %242 : vector<8x128xf32>
    %244 = arith.mulf %243, %243 : vector<8x128xf32>
    %cst_139 = arith.constant dense<0.000000e+00> : vector<128xf32>
    %245 = vector.multi_reduction <add>, %244, %cst_139 [0] : vector<8x128xf32> to vector<128xf32>
    %246 = vector.shape_cast %245 : vector<128xf32> to vector<1x128xf32>
    %cst_140 = arith.constant 8.000000e+00 : f32
    %247 = vector.broadcast %cst_140 : f32 to vector<1x128xf32>
    %248 = arith.divf %246, %247 : vector<1x128xf32>
    %249 = vector.broadcast %241 : vector<1x128xf32> to vector<8x128xf32>
    %250 = arith.subf %237, %249 : vector<8x128xf32>
    %cst_141 = arith.constant 8.000000e-01 : f32
    %251 = vector.broadcast %cst_141 : f32 to vector<1x128xf32>
    %252 = arith.addf %248, %251 : vector<1x128xf32>
    %253 = math.rsqrt %252 : vector<1x128xf32>
    %254 = vector.broadcast %253 : vector<1x128xf32> to vector<8x128xf32>
    %255 = arith.mulf %250, %254 : vector<8x128xf32>
    %c3_142 = arith.constant 3 : index
    %c0_143 = arith.constant 0 : index
    %c0_144 = arith.constant 0 : index
    %256 = vector.load %arg3[%c3_142, %c0_143, %c0_144] : memref<6x1x256xf32, #tpu.memory_space<vmem>>, vector<1x1x128xf32>
    %257 = vector.shape_cast %256 : vector<1x1x128xf32> to vector<1x128xf32>
    %258 = vector.broadcast %257 : vector<1x128xf32> to vector<8x128xf32>
    %259 = arith.mulf %255, %258 : vector<8x128xf32>
    %c3_145 = arith.constant 3 : index
    %c0_146 = arith.constant 0 : index
    %c0_147 = arith.constant 0 : index
    %260 = vector.load %arg4[%c3_145, %c0_146, %c0_147] : memref<6x1x256xf32, #tpu.memory_space<vmem>>, vector<1x1x128xf32>
    %261 = vector.shape_cast %260 : vector<1x1x128xf32> to vector<1x128xf32>
    %262 = vector.broadcast %261 : vector<1x128xf32> to vector<8x128xf32>
    %263 = arith.addf %259, %262 : vector<8x128xf32>
    %cst_148 = arith.constant 0.000000e+00 : f32
    %264 = vector.broadcast %cst_148 : f32 to vector<8x128xf32>
    %265 = arith.cmpf ogt, %263, %264 : vector<8x128xf32>
    %cst_149 = arith.constant 2.000000e-01 : f32
    %266 = vector.broadcast %cst_149 : f32 to vector<8x128xf32>
    %267 = arith.mulf %266, %263 : vector<8x128xf32>
    %268 = arith.select %265, %263, %267 : vector<8x128xi1>, vector<8x128xf32>
    %c11_150 = arith.constant 11 : index
    %c0_151 = arith.constant 0 : index
    %c0_152 = arith.constant 0 : index
    %269 = vector.load %arg9[%c11_150, %c0_151, %c0_152] : memref<12x128x128xf32, #tpu.memory_space<vmem>>, vector<1x128x128xf32>
    %270 = vector.shape_cast %269 : vector<1x128x128xf32> to vector<128x128xf32>
    %cst_153 = arith.constant dense<0.000000e+00> : vector<8x128xf32>
    %271 = tpu.matmul %268, %270, %cst_153 {dimension_numbers = #tpu.dot_dimension_numbers<[1], [0], [0], [1], [0, 0, 1, 1], [], []>} : vector<8x128xf32>, vector<128x128xf32>, vector<8x128xf32> -> vector<8x128xf32>
    %c13 = arith.constant 13 : index
    %c0_154 = arith.constant 0 : index
    %c0_155 = arith.constant 0 : index
    %272 = vector.load %arg2[%c13, %c0_154, %c0_155] : memref<16x1x256xf32, #tpu.memory_space<vmem>>, vector<1x1x128xf32>
    %273 = vector.shape_cast %272 : vector<1x1x128xf32> to vector<1x128xf32>
    %274 = vector.broadcast %273 : vector<1x128xf32> to vector<8x128xf32>
    %275 = arith.addf %271, %274 : vector<8x128xf32>
    %cst_156 = arith.constant dense<0.000000e+00> : vector<128xf32>
    %276 = vector.multi_reduction <add>, %275, %cst_156 [0] : vector<8x128xf32> to vector<128xf32>
    %277 = vector.shape_cast %276 : vector<128xf32> to vector<1x128xf32>
    %cst_157 = arith.constant 8.000000e+00 : f32
    %278 = vector.broadcast %cst_157 : f32 to vector<1x128xf32>
    %279 = arith.divf %277, %278 : vector<1x128xf32>
    %280 = vector.broadcast %279 : vector<1x128xf32> to vector<8x128xf32>
    %281 = arith.subf %275, %280 : vector<8x128xf32>
    %282 = arith.mulf %281, %281 : vector<8x128xf32>
    %cst_158 = arith.constant dense<0.000000e+00> : vector<128xf32>
    %283 = vector.multi_reduction <add>, %282, %cst_158 [0] : vector<8x128xf32> to vector<128xf32>
    %284 = vector.shape_cast %283 : vector<128xf32> to vector<1x128xf32>
    %cst_159 = arith.constant 8.000000e+00 : f32
    %285 = vector.broadcast %cst_159 : f32 to vector<1x128xf32>
    %286 = arith.divf %284, %285 : vector<1x128xf32>
    %287 = vector.broadcast %279 : vector<1x128xf32> to vector<8x128xf32>
    %288 = arith.subf %275, %287 : vector<8x128xf32>
    %cst_160 = arith.constant 8.000000e-01 : f32
    %289 = vector.broadcast %cst_160 : f32 to vector<1x128xf32>
    %290 = arith.addf %286, %289 : vector<1x128xf32>
    %291 = math.rsqrt %290 : vector<1x128xf32>
    %292 = vector.broadcast %291 : vector<1x128xf32> to vector<8x128xf32>
    %293 = arith.mulf %288, %292 : vector<8x128xf32>
    %c4_161 = arith.constant 4 : index
    %c0_162 = arith.constant 0 : index
    %c0_163 = arith.constant 0 : index
    %294 = vector.load %arg3[%c4_161, %c0_162, %c0_163] : memref<6x1x256xf32, #tpu.memory_space<vmem>>, vector<1x1x128xf32>
    %295 = vector.shape_cast %294 : vector<1x1x128xf32> to vector<1x128xf32>
    %296 = vector.broadcast %295 : vector<1x128xf32> to vector<8x128xf32>
    %297 = arith.mulf %293, %296 : vector<8x128xf32>
    %c4_164 = arith.constant 4 : index
    %c0_165 = arith.constant 0 : index
    %c0_166 = arith.constant 0 : index
    %298 = vector.load %arg4[%c4_164, %c0_165, %c0_166] : memref<6x1x256xf32, #tpu.memory_space<vmem>>, vector<1x1x128xf32>
    %299 = vector.shape_cast %298 : vector<1x1x128xf32> to vector<1x128xf32>
    %300 = vector.broadcast %299 : vector<1x128xf32> to vector<8x128xf32>
    %301 = arith.addf %297, %300 : vector<8x128xf32>
    %cst_167 = arith.constant 0.000000e+00 : f32
    %302 = vector.broadcast %cst_167 : f32 to vector<8x128xf32>
    %303 = arith.cmpf ogt, %301, %302 : vector<8x128xf32>
    %cst_168 = arith.constant 2.000000e-01 : f32
    %304 = vector.broadcast %cst_168 : f32 to vector<8x128xf32>
    %305 = arith.mulf %304, %301 : vector<8x128xf32>
    %306 = arith.select %303, %301, %305 : vector<8x128xi1>, vector<8x128xf32>
    %c1_169 = arith.constant 1 : index
    %c0_170 = arith.constant 0 : index
    %c0_171 = arith.constant 0 : index
    %307 = vector.load %arg10[%c1_169, %c0_170, %c0_171] : memref<2x128x256xf32, #tpu.memory_space<vmem>>, vector<1x128x256xf32>
    %308 = vector.shape_cast %307 : vector<1x128x256xf32> to vector<128x256xf32>
    %cst_172 = arith.constant dense<0.000000e+00> : vector<8x256xf32>
    %309 = tpu.matmul %306, %308, %cst_172 {dimension_numbers = #tpu.dot_dimension_numbers<[1], [0], [0], [1], [0, 0, 1, 1], [], []>} : vector<8x128xf32>, vector<128x256xf32>, vector<8x256xf32> -> vector<8x256xf32>
    %c14 = arith.constant 14 : index
    %c0_173 = arith.constant 0 : index
    %c0_174 = arith.constant 0 : index
    %310 = vector.load %arg2[%c14, %c0_173, %c0_174] : memref<16x1x256xf32, #tpu.memory_space<vmem>>, vector<1x1x256xf32>
    %311 = vector.shape_cast %310 : vector<1x1x256xf32> to vector<1x256xf32>
    %312 = vector.broadcast %311 : vector<1x256xf32> to vector<8x256xf32>
    %313 = arith.addf %309, %312 : vector<8x256xf32>
    %cst_175 = arith.constant dense<0.000000e+00> : vector<256xf32>
    %314 = vector.multi_reduction <add>, %313, %cst_175 [0] : vector<8x256xf32> to vector<256xf32>
    %315 = vector.shape_cast %314 : vector<256xf32> to vector<1x256xf32>
    %cst_176 = arith.constant 8.000000e+00 : f32
    %316 = vector.broadcast %cst_176 : f32 to vector<1x256xf32>
    %317 = arith.divf %315, %316 : vector<1x256xf32>
    %318 = vector.broadcast %317 : vector<1x256xf32> to vector<8x256xf32>
    %319 = arith.subf %313, %318 : vector<8x256xf32>
    %320 = arith.mulf %319, %319 : vector<8x256xf32>
    %cst_177 = arith.constant dense<0.000000e+00> : vector<256xf32>
    %321 = vector.multi_reduction <add>, %320, %cst_177 [0] : vector<8x256xf32> to vector<256xf32>
    %322 = vector.shape_cast %321 : vector<256xf32> to vector<1x256xf32>
    %cst_178 = arith.constant 8.000000e+00 : f32
    %323 = vector.broadcast %cst_178 : f32 to vector<1x256xf32>
    %324 = arith.divf %322, %323 : vector<1x256xf32>
    %325 = vector.broadcast %317 : vector<1x256xf32> to vector<8x256xf32>
    %326 = arith.subf %313, %325 : vector<8x256xf32>
    %cst_179 = arith.constant 8.000000e-01 : f32
    %327 = vector.broadcast %cst_179 : f32 to vector<1x256xf32>
    %328 = arith.addf %324, %327 : vector<1x256xf32>
    %329 = math.rsqrt %328 : vector<1x256xf32>
    %330 = vector.broadcast %329 : vector<1x256xf32> to vector<8x256xf32>
    %331 = arith.mulf %326, %330 : vector<8x256xf32>
    %c5_180 = arith.constant 5 : index
    %c0_181 = arith.constant 0 : index
    %c0_182 = arith.constant 0 : index
    %332 = vector.load %arg3[%c5_180, %c0_181, %c0_182] : memref<6x1x256xf32, #tpu.memory_space<vmem>>, vector<1x1x256xf32>
    %333 = vector.shape_cast %332 : vector<1x1x256xf32> to vector<1x256xf32>
    %334 = vector.broadcast %333 : vector<1x256xf32> to vector<8x256xf32>
    %335 = arith.mulf %331, %334 : vector<8x256xf32>
    %c5_183 = arith.constant 5 : index
    %c0_184 = arith.constant 0 : index
    %c0_185 = arith.constant 0 : index
    %336 = vector.load %arg4[%c5_183, %c0_184, %c0_185] : memref<6x1x256xf32, #tpu.memory_space<vmem>>, vector<1x1x256xf32>
    %337 = vector.shape_cast %336 : vector<1x1x256xf32> to vector<1x256xf32>
    %338 = vector.broadcast %337 : vector<1x256xf32> to vector<8x256xf32>
    %339 = arith.addf %335, %338 : vector<8x256xf32>
    %cst_186 = arith.constant 0.000000e+00 : f32
    %340 = vector.broadcast %cst_186 : f32 to vector<8x256xf32>
    %341 = arith.cmpf ogt, %339, %340 : vector<8x256xf32>
    %cst_187 = arith.constant 2.000000e-01 : f32
    %342 = vector.broadcast %cst_187 : f32 to vector<8x256xf32>
    %343 = arith.mulf %342, %339 : vector<8x256xf32>
    %344 = arith.select %341, %339, %343 : vector<8x256xi1>, vector<8x256xf32>
    %c1_188 = arith.constant 1 : index
    %c0_189 = arith.constant 0 : index
    %c0_190 = arith.constant 0 : index
    %345 = vector.load %arg11[%c1_188, %c0_189, %c0_190] : memref<2x256x128xf32, #tpu.memory_space<vmem>>, vector<1x256x128xf32>
    %346 = vector.shape_cast %345 : vector<1x256x128xf32> to vector<256x128xf32>
    %cst_191 = arith.constant dense<0.000000e+00> : vector<8x128xf32>
    %347 = tpu.matmul %344, %346, %cst_191 {dimension_numbers = #tpu.dot_dimension_numbers<[1], [0], [0], [1], [0, 0, 1, 1], [], []>} : vector<8x256xf32>, vector<256x128xf32>, vector<8x128xf32> -> vector<8x128xf32>
    %c15 = arith.constant 15 : index
    %c0_192 = arith.constant 0 : index
    %c0_193 = arith.constant 0 : index
    %348 = vector.load %arg2[%c15, %c0_192, %c0_193] : memref<16x1x256xf32, #tpu.memory_space<vmem>>, vector<1x1x128xf32>
    %349 = vector.shape_cast %348 : vector<1x1x128xf32> to vector<1x128xf32>
    %350 = vector.broadcast %349 : vector<1x128xf32> to vector<8x128xf32>
    %351 = arith.addf %347, %350 : vector<8x128xf32>
    %352 = math.tanh %351 : vector<8x128xf32>
    %c0_194 = arith.constant 0 : index
    %c0_195 = arith.constant 0 : index
    %353 = vector.load %arg8[%c0_194, %c0_195] : memref<8x128xf32, #tpu.memory_space<vmem>>, vector<8x128xf32>
    tpu.vector_store %arg8[%c0_194, %c0_195], %352 {strides = array<i32>} : memref<8x128xf32, #tpu.memory_space<vmem>>, vector<8x128xf32>,
    return
  }
  func.func @transform_0(%arg0: i32) -> (i32, i32) {
    %c0_i32 = arith.constant 0 : i32
    %c0_i32_0 = arith.constant 0 : i32
    %c0_i32_1 = arith.constant 0 : i32
    return %c0_i32, %c0_i32_0 : i32, i32
  }
  func.func @transform_1(%arg0: i32) -> (i32, i32, i32) {
    %c0_i32 = arith.constant 0 : i32
    %c0_i32_0 = arith.constant 0 : i32
    %c0_i32_1 = arith.constant 0 : i32
    %c0_i32_2 = arith.constant 0 : i32
    return %c0_i32, %c0_i32_0, %c0_i32_1 : i32, i32, i32
  }
  func.func @transform_2(%arg0: i32) -> (i32, i32, i32) {
    %c0_i32 = arith.constant 0 : i32
    %c0_i32_0 = arith.constant 0 : i32
    %c0_i32_1 = arith.constant 0 : i32
    %c0_i32_2 = arith.constant 0 : i32
    return %c0_i32, %c0_i32_0, %c0_i32_1 : i32, i32, i32
  }
  func.func @transform_3(%arg0: i32) -> (i32, i32, i32) {
    %c0_i32 = arith.constant 0 : i32
    %c0_i32_0 = arith.constant 0 : i32
    %c0_i32_1 = arith.constant 0 : i32
    %c0_i32_2 = arith.constant 0 : i32
    return %c0_i32, %c0_i32_0, %c0_i32_1 : i32, i32, i32
  }
  func.func @transform_7(%arg0: i32) -> (i32, i32) {
    %c0_i32 = arith.constant 0 : i32
    %c0_i32_0 = arith.constant 0 : i32
    %c0_i32_1 = arith.constant 0 : i32
    return %c0_i32, %c0_i32_0 : i32, i32
  }
}

</mosaic_0001>

<llo_original>
// kernel: autoencoder_forward.1
$region0: #{autoencoder_forward.1}
  #allocation0 [shape = 'u32[]', space=smem, size = 0x4, offset = 0x4, fixed_abs, tag = 'smem constant byte address 0x4 - core index']
  #allocation1 [shape = 'u32[72,128]{1,0:T(1,128)}', space=vmem, size = 0x9000, scoped, tag = 'internal scratch']
  #allocation2 [shape = 'f32[12,128,128]{2,1,0:T(8,128)}', space=vmem, size = 0xc0000, scoped, tag = 'scratch operand']
  #allocation3 [shape = 'f32[2,128,256]{2,1,0:T(8,128)}', space=vmem, size = 0x40000, scoped, tag = 'scratch operand']
  #allocation4 [shape = 'f32[2,256,128]{2,1,0:T(8,128)}', space=vmem, size = 0x40000, scoped, tag = 'scratch operand']
  #allocation5 [shape = 's32[3]{0}', space=sflag, size = 0xc, scoped, tag = 'scratch operand']
  #allocation12 [shape = 's32[]', space=sflag, size = 0x4, offset = 0, fixed_abs, tag = 'sflag constant byte address 0x0 - dummy sync flag']
  #allocation13 [shape = 's32[]', space=sflag, size = 0x4, offset = 0, fixed_abs, tag = 'sflag constant byte address 0x0 - dummy sync flag']
  #allocation14 [shape = 'u32[]', space=smem, size = 0x4, offset = 0x44, fixed_abs, tag = 'smem constant byte address 0x44 - assertion arg 0']
  #allocation15 [shape = 'u32[]', space=smem, size = 0x4, offset = 0x48, fixed_abs, tag = 'smem constant byte address 0x48 - assertion arg 1']
  #allocation16 [shape = 's32[]', space=sflag, size = 0x4, offset = 0, fixed_abs, tag = 'sflag constant byte address 0x0 - dummy sync flag']
  #allocation17 [shape = 's32[]', space=sflag, size = 0x4, offset = 0, fixed_abs, tag = 'sflag constant byte address 0x0 - dummy sync flag']
  #allocation18 [shape = 's32[]', space=sflag, size = 0x4, offset = 0, fixed_abs, tag = 'sflag constant byte address 0x0 - dummy sync flag']
  #allocation19 [shape = 's32[]', space=sflag, size = 0x4, offset = 0, fixed_abs, tag = 'sflag constant byte address 0x0 - dummy sync flag']
  %s0 = inlined_call_operand.vmem [shape: f32[8,128], index: 0, kind: input, shape index: {}]
  %s1 = inlined_call_operand.vmem [shape: f32[16,1,256], index: 1, kind: input, shape index: {}]
  %s2 = inlined_call_operand.hbm [shape: f32[6,1,256], index: 2, kind: input, shape index: {}]
  %s3 = inlined_call_operand.hbm [shape: f32[6,1,256], index: 3, kind: input, shape index: {}]
  %s4 = inlined_call_operand.hbm [shape: f32[12,128,128], index: 4, kind: input, shape index: {}]
  %s5 = inlined_call_operand.hbm [shape: f32[2,128,256], index: 5, kind: input, shape index: {}]
  %s6 = inlined_call_operand.hbm [shape: f32[2,256,128], index: 6, kind: input, shape index: {}]
  %s7 = inlined_call_operand.hbm [shape: f32[8,128], index: 7, kind: output, shape index: {}]
  %s8 = sld [smem:[#allocation0]]
  $region46: #{autoencoder_forward.1} parent=0
    _
  %s10 = ssub.s32 1, %s8
  %s11 = scalar_select 0, %s10, %s8
  $region1: #{autoencoder_forward.1} parent=0
    #allocation6 [shape = 'u8[6144]{0}', space=vmem, size = 0x1800, scoped, tag = 'input window, operand 2, single buffered']
    #allocation7 [shape = 's32[1]{0}', space=sflag, size = 0x4, scoped, tag = 'scoped memory for autoencoder_forward.1']
    #allocation8 [shape = 's32[1]{0}', space=sflag, size = 0x4, scoped, tag = 'scoped memory for autoencoder_forward.1']
    #allocation9 [shape = 'u8[6144]{0}', space=vmem, size = 0x1800, scoped, tag = 'input window, operand 3, single buffered']
    #allocation10 [shape = 's32[1]{0}', space=sflag, size = 0x4, scoped, tag = 'scoped memory for autoencoder_forward.1']
    #allocation11 [shape = 'u8[4096]{0}', space=vmem, size = 0x1000, scoped, tag = 'output window, operand 0, single buffered']
    %12 = vsyncpa [#allocation7], 0
    %13 = vsyncpa [#allocation10], 0
    %14 = vsyncpa [#allocation8], 0
    // Predicated region
    $region2: #{autoencoder_forward.1} parent=1 // pred_check
      _
    $region3: #{autoencoder_forward.1} parent=1 // pred_check_branch
      %16 = sbr.rel (0) target = $region5
    $region4: #{autoencoder_forward.1} parent=1 // pred_region
      _
    $region5: #{autoencoder_forward.1} parent=1 // pred_fallthru
      _
    // Predicated region
    $region6: #{autoencoder_forward.1} parent=1 // pred_check
      _
    $region7: #{autoencoder_forward.1} parent=1 // pred_check_branch
      %18 = sbr.rel (0) target = $region9
    $region8: #{autoencoder_forward.1} parent=1 // pred_region
      _
    $region9: #{autoencoder_forward.1} parent=1 // pred_fallthru
      _
    // Predicated region
    $region10: #{autoencoder_forward.1} parent=1 // pred_check
      _
    $region11: #{autoencoder_forward.1} parent=1 // pred_check_branch
      %20 = sbr.rel (0) target = $region13
    $region12: #{autoencoder_forward.1} parent=1 // pred_region
      %22 = vsyncadd [#allocation7], 0
      %s23 = sshll.u32 %s2, 4
      %s24 = int_to_ptr.hbm [resolvable:$true] %s23
      %s25 = sshll.u32 [#allocation6], 4
      %s26 = int_to_ptr.vmem [resolvable:$true] %s25
      %31 = dma.hbm_to_vmem [thread:$0]  %s24, 192, %s26, [#allocation7], 32, 32, 2
    $region13: #{autoencoder_forward.1} parent=1 // pred_fallthru
      _
    // Predicated region
    $region14: #{autoencoder_forward.1} parent=1 // pred_check
      _
    $region15: #{autoencoder_forward.1} parent=1 // pred_check_branch
      %33 = sbr.rel (0) target = $region17
    $region16: #{autoencoder_forward.1} parent=1 // pred_region
      %35 = vsyncadd [#allocation10], 0
      %s36 = sshll.u32 %s3, 4
      %s37 = int_to_ptr.hbm [resolvable:$true] %s36
      %s38 = sshll.u32 [#allocation9], 4
      %s39 = int_to_ptr.vmem [resolvable:$true] %s38
      %44 = dma.hbm_to_vmem [thread:$0]  %s37, 192, %s39, [#allocation10], 32, 32, 2
    $region17: #{autoencoder_forward.1} parent=1 // pred_fallthru
      _
    // Predicated region
    $region18: #{autoencoder_forward.1} parent=1 // pred_check
      _
    $region19: #{autoencoder_forward.1} parent=1 // pred_check_branch
      %46 = sbr.rel (0) target = $region21
    $region20: #{autoencoder_forward.1} parent=1 // pred_region
      %48 = dma.done [#allocation7], 192
    $region21: #{autoencoder_forward.1} parent=1 // pred_fallthru
      _
    // Predicated region
    $region22: #{autoencoder_forward.1} parent=1 // pred_check
      _
    $region23: #{autoencoder_forward.1} parent=1 // pred_check_branch
      %50 = sbr.rel (0) target = $region25
    $region24: #{autoencoder_forward.1} parent=1 // pred_region
      %52 = dma.done [#allocation10], 192
    $region25: #{autoencoder_forward.1} parent=1 // pred_fallthru
      _
    // Predicated region
    $region26: #{autoencoder_forward.1} parent=1 // pred_check
      _
    $region27: #{autoencoder_forward.1} parent=1 // pred_check_branch
      %54 = sbr.rel target = $region29
    $region28: #{autoencoder_forward.1} parent=1 // pred_region
      %55 = sst [smem:[#allocation14]] [#allocation13]
      %56 = sst [smem:[#allocation15]] [#allocation12]
    $region29: #{autoencoder_forward.1} parent=1 // pred_fallthru
      _
    %58 = shalt.err (0)
    %s60 = sshll.u32 %s5, 4
    %s61 = int_to_ptr.hbm [resolvable:$true] %s60
    %s62 = sshll.u32 [#allocation3], 4
    %s63 = int_to_ptr.vmem [resolvable:$true] %s62
    %65 = dma.hbm_to_vmem [thread:$0]  %s61, 8192, %s63, [#allocation5]
    %s66 = scalar_lea.sflag [#allocation5], 1
    // Predicated region
    $region30: #{autoencoder_forward.1} parent=1 // pred_check
      _
    $region31: #{autoencoder_forward.1} parent=1 // pred_check_branch
      %68 = sbr.rel target = $region33
    $region32: #{autoencoder_forward.1} parent=1 // pred_region
      %69 = sst [smem:[#allocation14]] [#allocation17]
      %70 = sst [smem:[#allocation15]] [#allocation16]
    $region33: #{autoencoder_forward.1} parent=1 // pred_fallthru
      _
    %72 = shalt.err (0)
    %s74 = sshll.u32 %s6, 4
    %s75 = int_to_ptr.hbm [resolvable:$true] %s74
    %s76 = sshll.u32 [#allocation4], 4
    %s77 = int_to_ptr.vmem [resolvable:$true] %s76
    %79 = dma.hbm_to_vmem [thread:$0]  %s75, 8192, %s77, %s66
    %s80 = scalar_lea.sflag [#allocation5], 2
    // Predicated region
    $region34: #{autoencoder_forward.1} parent=1 // pred_check
      _
    $region35: #{autoencoder_forward.1} parent=1 // pred_check_branch
      %82 = sbr.rel target = $region37
    $region36: #{autoencoder_forward.1} parent=1 // pred_region
      %83 = sst [smem:[#allocation14]] [#allocation19]
      %84 = sst [smem:[#allocation15]] [#allocation18]
    $region37: #{autoencoder_forward.1} parent=1 // pred_fallthru
      _
    %86 = shalt.err (0)
    %s88 = sshll.u32 %s4, 4
    %s89 = int_to_ptr.hbm [resolvable:$true] %s88
    %s90 = sshll.u32 [#allocation2], 4
    %s91 = int_to_ptr.vmem [resolvable:$true] %s90
    %93 = dma.hbm_to_vmem [thread:$0]  %s89, 24576, %s91, %s80
    %v94 = vld [vmem:[%s0] sm:$0xff]
    %s95 = smul.u32 8, 2
    %s96 = smul.u32 %s95, 16
    %s97 = smul.u32 %s96, 2
    %s98 = sshll.u32 %s97, 4
    %99 = dma.done [#allocation5], %s98
    %v100 = vld [vmem:[#allocation3] sm:$0xff]
    %v101 = vld [vmem:[#allocation3 + $0x8] sm:$0xff]
    %v102 = vld [vmem:[#allocation3 + $0x10] sm:$0xff]
    %v103 = vld [vmem:[#allocation3 + $0x18] sm:$0xff]
    %v104 = vld [vmem:[#allocation3 + $0x20] sm:$0xff]
    %v105 = vld [vmem:[#allocation3 + $0x28] sm:$0xff]
    %v106 = vld [vmem:[#allocation3 + $0x30] sm:$0xff]
    %v107 = vld [vmem:[#allocation3 + $0x38] sm:$0xff]
    %v108 = vld [vmem:[#allocation3 + $0x40] sm:$0xff]
    %v109 = vld [vmem:[#allocation3 + $0x48] sm:$0xff]
    %v110 = vld [vmem:[#allocation3 + $0x50] sm:$0xff]
    %v111 = vld [vmem:[#allocation3 + $0x58] sm:$0xff]
    %v112 = vld [vmem:[#allocation3 + $0x60] sm:$0xff]
    %v113 = vld [vmem:[#allocation3 + $0x68] sm:$0xff]
    %v114 = vld [vmem:[#allocation3 + $0x70] sm:$0xff]
    %v115 = vld [vmem:[#allocation3 + $0x78] sm:$0xff]
    %v116 = vld [vmem:[#allocation3 + $0x80] sm:$0xff]
    %v117 = vld [vmem:[#allocation3 + $0x88] sm:$0xff]
    %v118 = vld [vmem:[#allocation3 + $0x90] sm:$0xff]
    %v119 = vld [vmem:[#allocation3 + $0x98] sm:$0xff]
    %v120 = vld [vmem:[#allocation3 + $0xa0] sm:$0xff]
    %v121 = vld [vmem:[#allocation3 + $0xa8] sm:$0xff]
    %v122 = vld [vmem:[#allocation3 + $0xb0] sm:$0xff]
    %v123 = vld [vmem:[#allocation3 + $0xb8] sm:$0xff]
    %v124 = vld [vmem:[#allocation3 + $0xc0] sm:$0xff]
    %v125 = vld [vmem:[#allocation3 + $0xc8] sm:$0xff]
    %v126 = vld [vmem:[#allocation3 + $0xd0] sm:$0xff]
    %v127 = vld [vmem:[#allocation3 + $0xd8] sm:$0xff]
    %v128 = vld [vmem:[#allocation3 + $0xe0] sm:$0xff]
    %v129 = vld [vmem:[#allocation3 + $0xe8] sm:$0xff]
    %v130 = vld [vmem:[#allocation3 + $0xf0] sm:$0xff]
    %v131 = vld [vmem:[#allocation3 + $0xf8] sm:$0xff]
    %v132 = vld [vmem:[%s1] sm:$0x3]
    %v134 = vperm.slane %v132, 0
    %v135 = vperm.slane %v132, 1
    %138 = vmatpush.msra.mxu0 %v130
    %139 = vmatpush.msra.mxu0 %v128
    %140 = vmatpush.msra.mxu0 %v126
    %141 = vmatpush.msra.mxu0 %v124
    %142 = vmatpush.msra.mxu0 %v122
    %143 = vmatpush.msra.mxu0 %v120
    %144 = vmatpush.msra.mxu0 %v118
    %145 = vmatpush.msra.mxu0 %v116
    %146 = vmatpush.msra.mxu0 %v114
    %147 = vmatpush.msra.mxu0 %v112
    %148 = vmatpush.msra.mxu0 %v110
    %149 = vmatpush.msra.mxu0 %v108
    %150 = vmatpush.msra.mxu0 %v106
    %151 = vmatpush.msra.mxu0 %v104
    %152 = vmatpush.msra.mxu0 %v102
    %153 = vmatpush.msra.mxu0 %v100
    %154 = vmatmul.f32.gmra.mxu0 %v94
    %v155 = vpop.f32.mrf.mxu0
    %v156 = vadd.f32 %v134, %v155
    %157 = vdwg.mxu0
    %158 = vmatpush.msra.mxu0 %v131
    %159 = vmatpush.msra.mxu0 %v129
    %160 = vmatpush.msra.mxu0 %v127
    %161 = vmatpush.msra.mxu0 %v125
    %162 = vmatpush.msra.mxu0 %v123
    %163 = vmatpush.msra.mxu0 %v121
    %164 = vmatpush.msra.mxu0 %v119
    %165 = vmatpush.msra.mxu0 %v117
    %166 = vmatpush.msra.mxu0 %v115
    %167 = vmatpush.msra.mxu0 %v113
    %168 = vmatpush.msra.mxu0 %v111
    %169 = vmatpush.msra.mxu0 %v109
    %170 = vmatpush.msra.mxu0 %v107
    %171 = vmatpush.msra.mxu0 %v105
    %172 = vmatpush.msra.mxu0 %v103
    %173 = vmatpush.msra.mxu0 %v101
    %174 = vmatmul.f32.gmra.mxu0 %v94
    %v175 = vpop.f32.mrf.mxu0
    %v176 = vadd.f32 %v135, %v175
    %177 = vdwg.mxu0
    %vm178 = vcmp.gt.f32.partialorder %v156, 0.0
    %vm179 = vcmp.gt.f32.partialorder %v176, 0.0
    %v180 = vmul.f32 %v156, 0.2
    %v181 = vmul.f32 %v176, 0.2
    %v182 = vsel %vm178, %v156, %v180
    %v183 = vsel %vm179, %v176, %v181
    %s184 = smul.u32 2, 256
    %s185 = smul.u32 %s184, 1
    %s186 = sshll.u32 %s185, 4
    %187 = dma.done %s66, %s186
    %v188 = vld [vmem:[#allocation4] sm:$0xff]
    %v189 = vld [vmem:[#allocation4 + $0x8] sm:$0xff]
    %v190 = vld [vmem:[#allocation4 + $0x10] sm:$0xff]
    %v191 = vld [vmem:[#allocation4 + $0x18] sm:$0xff]
    %v192 = vld [vmem:[#allocation4 + $0x20] sm:$0xff]
    %v193 = vld [vmem:[#allocation4 + $0x28] sm:$0xff]
    %v194 = vld [vmem:[#allocation4 + $0x30] sm:$0xff]
    %v195 = vld [vmem:[#allocation4 + $0x38] sm:$0xff]
    %v196 = vld [vmem:[#allocation4 + $0x40] sm:$0xff]
    %v197 = vld [vmem:[#allocation4 + $0x48] sm:$0xff]
    %v198 = vld [vmem:[#allocation4 + $0x50] sm:$0xff]
    %v199 = vld [vmem:[#allocation4 + $0x58] sm:$0xff]
    %v200 = vld [vmem:[#allocation4 + $0x60] sm:$0xff]
    %v201 = vld [vmem:[#allocation4 + $0x68] sm:$0xff]
    %v202 = vld [vmem:[#allocation4 + $0x70] sm:$0xff]
    %v203 = vld [vmem:[#allocation4 + $0x78] sm:$0xff]
    %v204 = vld [vmem:[#allocation4 + $0x80] sm:$0xff]
    %v205 = vld [vmem:[#allocation4 + $0x88] sm:$0xff]
    %v206 = vld [vmem:[#allocation4 + $0x90] sm:$0xff]
    %v207 = vld [vmem:[#allocation4 + $0x98] sm:$0xff]
    %v208 = vld [vmem:[#allocation4 + $0xa0] sm:$0xff]
    %v209 = vld [vmem:[#allocation4 + $0xa8] sm:$0xff]
    %v210 = vld [vmem:[#allocation4 + $0xb0] sm:$0xff]
    %v211 = vld [vmem:[#allocation4 + $0xb8] sm:$0xff]
    %v212 = vld [vmem:[#allocation4 + $0xc0] sm:$0xff]
    %v213 = vld [vmem:[#allocation4 + $0xc8] sm:$0xff]
    %v214 = vld [vmem:[#allocation4 + $0xd0] sm:$0xff]
    %v215 = vld [vmem:[#allocation4 + $0xd8] sm:$0xff]
    %v216 = vld [vmem:[#allocation4 + $0xe0] sm:$0xff]
    %v217 = vld [vmem:[#allocation4 + $0xe8] sm:$0xff]
    %v218 = vld [vmem:[#allocation4 + $0xf0] sm:$0xff]
    %v219 = vld [vmem:[#allocation4 + $0xf8] sm:$0xff]
    %s220 = scalar_lea.vmem %s1, 2
    %v221 = vld [vmem:[%s220] sm:$0x1]
    %v223 = vperm.slane %v221, 0
    %225 = vmatpush.msra.mxu0 %v203
    %226 = vmatpush.msra.mxu0 %v202
    %227 = vmatpush.msra.mxu0 %v201
    %228 = vmatpush.msra.mxu0 %v200
    %229 = vmatpush.msra.mxu0 %v199
    %230 = vmatpush.msra.mxu0 %v198
    %231 = vmatpush.msra.mxu0 %v197
    %232 = vmatpush.msra.mxu0 %v196
    %233 = vmatpush.msra.mxu0 %v195
    %234 = vmatpush.msra.mxu0 %v194
    %235 = vmatpush.msra.mxu0 %v193
    %236 = vmatpush.msra.mxu0 %v192
    %237 = vmatpush.msra.mxu0 %v191
    %238 = vmatpush.msra.mxu0 %v190
    %239 = vmatpush.msra.mxu0 %v189
    %240 = vmatpush.msra.mxu0 %v188
    %241 = vmatmul.f32.gmra.mxu0 %v182
    %v242 = vpop.f32.mrf.mxu0
    %v243 = vadd.f32 %v223, %v242
    %244 = vdwg.mxu0
    %245 = vmatpush.msra.mxu0 %v219
    %246 = vmatpush.msra.mxu0 %v218
    %247 = vmatpush.msra.mxu0 %v217
    %248 = vmatpush.msra.mxu0 %v216
    %249 = vmatpush.msra.mxu0 %v215
    %250 = vmatpush.msra.mxu0 %v214
    %251 = vmatpush.msra.mxu0 %v213
    %252 = vmatpush.msra.mxu0 %v212
    %253 = vmatpush.msra.mxu0 %v211
    %254 = vmatpush.msra.mxu0 %v210
    %255 = vmatpush.msra.mxu0 %v209
    %256 = vmatpush.msra.mxu0 %v208
    %257 = vmatpush.msra.mxu0 %v207
    %258 = vmatpush.msra.mxu0 %v206
    %259 = vmatpush.msra.mxu0 %v205
    %260 = vmatpush.msra.mxu0 %v204
    %261 = vmatmul.f32.gmra.mxu0 %v183
    %v262 = vpop.f32.mrf.mxu0
    %v263 = vadd.f32 %v243, %v262
    %264 = vdwg.mxu0
    %vm265 = vcmp.gt.f32.partialorder %v263, 0.0
    %v266 = vmul.f32 %v263, 0.2
    %v267 = vsel %vm265, %v263, %v266
    %s268 = smul.u32 12, 128
    %s269 = smul.u32 %s268, 1
    %s270 = sshll.u32 %s269, 4
    %271 = dma.done %s80, %s270
    %v272 = vld [vmem:[#allocation2] sm:$0xff]
    %v273 = vld [vmem:[#allocation2 + $0x8] sm:$0xff]
    %v274 = vld [vmem:[#allocation2 + $0x10] sm:$0xff]
    %v275 = vld [vmem:[#allocation2 + $0x18] sm:$0xff]
    %v276 = vld [vmem:[#allocation2 + $0x20] sm:$0xff]
    %v277 = vld [vmem:[#allocation2 + $0x28] sm:$0xff]
    %v278 = vld [vmem:[#allocation2 + $0x30] sm:$0xff]
    %v279 = vld [vmem:[#allocation2 + $0x38] sm:$0xff]
    %v280 = vld [vmem:[#allocation2 + $0x40] sm:$0xff]
    %v281 = vld [vmem:[#allocation2 + $0x48] sm:$0xff]
    %v282 = vld [vmem:[#allocation2 + $0x50] sm:$0xff]
    %v283 = vld [vmem:[#allocation2 + $0x58] sm:$0xff]
    %v284 = vld [vmem:[#allocation2 + $0x60] sm:$0xff]
    %v285 = vld [vmem:[#allocation2 + $0x68] sm:$0xff]
    %v286 = vld [vmem:[#allocation2 + $0x70] sm:$0xff]
    %v287 = vld [vmem:[#allocation2 + $0x78] sm:$0xff]
    %s288 = scalar_lea.vmem %s1, 4
    %v289 = vld [vmem:[%s288] sm:$0x1]
    %v291 = vperm.slane %v289, 0
    %293 = vmatpush.msra.mxu0 %v287
    %294 = vmatpush.msra.mxu0 %v286
    %295 = vmatpush.msra.mxu0 %v285
    %296 = vmatpush.msra.mxu0 %v284
    %297 = vmatpush.msra.mxu0 %v283
    %298 = vmatpush.msra.mxu0 %v282
    %299 = vmatpush.msra.mxu0 %v281
    %300 = vmatpush.msra.mxu0 %v280
    %301 = vmatpush.msra.mxu0 %v279
    %302 = vmatpush.msra.mxu0 %v278
    %303 = vmatpush.msra.mxu0 %v277
    %304 = vmatpush.msra.mxu0 %v276
    %305 = vmatpush.msra.mxu0 %v275
    %306 = vmatpush.msra.mxu0 %v274
    %307 = vmatpush.msra.mxu0 %v273
    %308 = vmatpush.msra.mxu0 %v272
    %309 = vmatmul.f32.gmra.mxu0 %v267
    %v310 = vpop.f32.mrf.mxu0
    %v311 = vadd.f32 %v291, %v310
    %312 = vdwg.mxu0
    %vm313 = vcmp.gt.f32.partialorder %v311, 0.0
    %v314 = vmul.f32 %v311, 0.2
    %v315 = vsel %vm313, %v311, %v314
    %s316 = scalar_lea.vmem [#allocation2], 128
    %v317 = vld [vmem:[%s316] sm:$0xff]
    %v318 = vld [vmem:[%s316 + $0x8] sm:$0xff]
    %v319 = vld [vmem:[%s316 + $0x10] sm:$0xff]
    %v320 = vld [vmem:[%s316 + $0x18] sm:$0xff]
    %v321 = vld [vmem:[%s316 + $0x20] sm:$0xff]
    %v322 = vld [vmem:[%s316 + $0x28] sm:$0xff]
    %v323 = vld [vmem:[%s316 + $0x30] sm:$0xff]
    %v324 = vld [vmem:[%s316 + $0x38] sm:$0xff]
    %v325 = vld [vmem:[%s316 + $0x40] sm:$0xff]
    %v326 = vld [vmem:[%s316 + $0x48] sm:$0xff]
    %v327 = vld [vmem:[%s316 + $0x50] sm:$0xff]
    %v328 = vld [vmem:[%s316 + $0x58] sm:$0xff]
    %v329 = vld [vmem:[%s316 + $0x60] sm:$0xff]
    %v330 = vld [vmem:[%s316 + $0x68] sm:$0xff]
    %v331 = vld [vmem:[%s316 + $0x70] sm:$0xff]
    %v332 = vld [vmem:[%s316 + $0x78] sm:$0xff]
    %s333 = scalar_lea.vmem %s1, 6
    %v334 = vld [vmem:[%s333] sm:$0x1]
    %v336 = vperm.slane %v334, 0
    %338 = vmatpush.msra.mxu0 %v332
    %339 = vmatpush.msra.mxu0 %v331
    %340 = vmatpush.msra.mxu0 %v330
    %341 = vmatpush.msra.mxu0 %v329
    %342 = vmatpush.msra.mxu0 %v328
    %343 = vmatpush.msra.mxu0 %v327
    %344 = vmatpush.msra.mxu0 %v326
    %345 = vmatpush.msra.mxu0 %v325
    %346 = vmatpush.msra.mxu0 %v324
    %347 = vmatpush.msra.mxu0 %v323
    %348 = vmatpush.msra.mxu0 %v322
    %349 = vmatpush.msra.mxu0 %v321
    %350 = vmatpush.msra.mxu0 %v320
    %351 = vmatpush.msra.mxu0 %v319
    %352 = vmatpush.msra.mxu0 %v318
    %353 = vmatpush.msra.mxu0 %v317
    %354 = vmatmul.f32.gmra.mxu0 %v315
    %v355 = vpop.f32.mrf.mxu0
    %v356 = vadd.f32 %v336, %v355
    %357 = vdwg.mxu0
    %vm358 = vcmp.gt.f32.partialorder %v356, 0.0
    %v359 = vmul.f32 %v356, 0.2
    %v360 = vsel %vm358, %v356, %v359
    %s361 = scalar_lea.vmem [#allocation2], 256
    %v362 = vld [vmem:[%s361] sm:$0xff]
    %v363 = vld [vmem:[%s361 + $0x8] sm:$0xff]
    %v364 = vld [vmem:[%s361 + $0x10] sm:$0xff]
    %v365 = vld [vmem:[%s361 + $0x18] sm:$0xff]
    %v366 = vld [vmem:[%s361 + $0x20] sm:$0xff]
    %v367 = vld [vmem:[%s361 + $0x28] sm:$0xff]
    %v368 = vld [vmem:[%s361 + $0x30] sm:$0xff]
    %v369 = vld [vmem:[%s361 + $0x38] sm:$0xff]
    %v370 = vld [vmem:[%s361 + $0x40] sm:$0xff]
    %v371 = vld [vmem:[%s361 + $0x48] sm:$0xff]
    %v372 = vld [vmem:[%s361 + $0x50] sm:$0xff]
    %v373 = vld [vmem:[%s361 + $0x58] sm:$0xff]
    %v374 = vld [vmem:[%s361 + $0x60] sm:$0xff]
    %v375 = vld [vmem:[%s361 + $0x68] sm:$0xff]
    %v376 = vld [vmem:[%s361 + $0x70] sm:$0xff]
    %v377 = vld [vmem:[%s361 + $0x78] sm:$0xff]
    %s378 = scalar_lea.vmem %s1, 8
    %v379 = vld [vmem:[%s378] sm:$0x1]
    %v381 = vperm.slane %v379, 0
    %383 = vmatpush.msra.mxu0 %v377
    %384 = vmatpush.msra.mxu0 %v376
    %385 = vmatpush.msra.mxu0 %v375
    %386 = vmatpush.msra.mxu0 %v374
    %387 = vmatpush.msra.mxu0 %v373
    %388 = vmatpush.msra.mxu0 %v372
    %389 = vmatpush.msra.mxu0 %v371
    %390 = vmatpush.msra.mxu0 %v370
    %391 = vmatpush.msra.mxu0 %v369
    %392 = vmatpush.msra.mxu0 %v368
    %393 = vmatpush.msra.mxu0 %v367
    %394 = vmatpush.msra.mxu0 %v366
    %395 = vmatpush.msra.mxu0 %v365
    %396 = vmatpush.msra.mxu0 %v364
    %397 = vmatpush.msra.mxu0 %v363
    %398 = vmatpush.msra.mxu0 %v362
    %399 = vmatmul.f32.gmra.mxu0 %v360
    %v400 = vpop.f32.mrf.mxu0
    %v401 = vadd.f32 %v381, %v400
    %402 = vdwg.mxu0
    %vm403 = vcmp.gt.f32.partialorder %v401, 0.0
    %v404 = vmul.f32 %v401, 0.2
    %v405 = vsel %vm403, %v401, %v404
    %s406 = scalar_lea.vmem [#allocation2], 384
    %v407 = vld [vmem:[%s406] sm:$0xff]
    %v408 = vld [vmem:[%s406 + $0x8] sm:$0xff]
    %v409 = vld [vmem:[%s406 + $0x10] sm:$0xff]
    %v410 = vld [vmem:[%s406 + $0x18] sm:$0xff]
    %v411 = vld [vmem:[%s406 + $0x20] sm:$0xff]
    %v412 = vld [vmem:[%s406 + $0x28] sm:$0xff]
    %v413 = vld [vmem:[%s406 + $0x30] sm:$0xff]
    %v414 = vld [vmem:[%s406 + $0x38] sm:$0xff]
    %v415 = vld [vmem:[%s406 + $0x40] sm:$0xff]
    %v416 = vld [vmem:[%s406 + $0x48] sm:$0xff]
    %v417 = vld [vmem:[%s406 + $0x50] sm:$0xff]
    %v418 = vld [vmem:[%s406 + $0x58] sm:$0xff]
    %v419 = vld [vmem:[%s406 + $0x60] sm:$0xff]
    %v420 = vld [vmem:[%s406 + $0x68] sm:$0xff]
    %v421 = vld [vmem:[%s406 + $0x70] sm:$0xff]
    %v422 = vld [vmem:[%s406 + $0x78] sm:$0xff]
    %s423 = scalar_lea.vmem %s1, 10
    %v424 = vld [vmem:[%s423] sm:$0x1]
    %v426 = vperm.slane %v424, 0
    %428 = vmatpush.msra.mxu0 %v422
    %429 = vmatpush.msra.mxu0 %v421
    %430 = vmatpush.msra.mxu0 %v420
    %431 = vmatpush.msra.mxu0 %v419
    %432 = vmatpush.msra.mxu0 %v418
    %433 = vmatpush.msra.mxu0 %v417
    %434 = vmatpush.msra.mxu0 %v416
    %435 = vmatpush.msra.mxu0 %v415
    %436 = vmatpush.msra.mxu0 %v414
    %437 = vmatpush.msra.mxu0 %v413
    %438 = vmatpush.msra.mxu0 %v412
    %439 = vmatpush.msra.mxu0 %v411
    %440 = vmatpush.msra.mxu0 %v410
    %441 = vmatpush.msra.mxu0 %v409
    %442 = vmatpush.msra.mxu0 %v408
    %443 = vmatpush.msra.mxu0 %v407
    %444 = vmatmul.f32.gmra.mxu0 %v405
    %v445 = vpop.f32.mrf.mxu0
    %v446 = vadd.f32 %v426, %v445
    %447 = vdwg.mxu0
    %vm448 = vcmp.gt.f32.partialorder %v446, 0.0
    %v449 = vmul.f32 %v446, 0.2
    %v450 = vsel %vm448, %v446, %v449
    %s451 = scalar_lea.vmem [#allocation2], 512
    %v452 = vld [vmem:[%s451] sm:$0xff]
    %v453 = vld [vmem:[%s451 + $0x8] sm:$0xff]
    %v454 = vld [vmem:[%s451 + $0x10] sm:$0xff]
    %v455 = vld [vmem:[%s451 + $0x18] sm:$0xff]
    %v456 = vld [vmem:[%s451 + $0x20] sm:$0xff]
    %v457 = vld [vmem:[%s451 + $0x28] sm:$0xff]
    %v458 = vld [vmem:[%s451 + $0x30] sm:$0xff]
    %v459 = vld [vmem:[%s451 + $0x38] sm:$0xff]
    %v460 = vld [vmem:[%s451 + $0x40] sm:$0xff]
    %v461 = vld [vmem:[%s451 + $0x48] sm:$0xff]
    %v462 = vld [vmem:[%s451 + $0x50] sm:$0xff]
    %v463 = vld [vmem:[%s451 + $0x58] sm:$0xff]
    %v464 = vld [vmem:[%s451 + $0x60] sm:$0xff]
    %v465 = vld [vmem:[%s451 + $0x68] sm:$0xff]
    %v466 = vld [vmem:[%s451 + $0x70] sm:$0xff]
    %v467 = vld [vmem:[%s451 + $0x78] sm:$0xff]
    %s468 = scalar_lea.vmem %s1, 12
    %v469 = vld [vmem:[%s468] sm:$0x1]
    %v471 = vperm.slane %v469, 0
    %473 = vmatpush.msra.mxu0 %v467
    %474 = vmatpush.msra.mxu0 %v466
    %475 = vmatpush.msra.mxu0 %v465
    %476 = vmatpush.msra.mxu0 %v464
    %477 = vmatpush.msra.mxu0 %v463
    %478 = vmatpush.msra.mxu0 %v462
    %479 = vmatpush.msra.mxu0 %v461
    %480 = vmatpush.msra.mxu0 %v460
    %481 = vmatpush.msra.mxu0 %v459
    %482 = vmatpush.msra.mxu0 %v458
    %483 = vmatpush.msra.mxu0 %v457
    %484 = vmatpush.msra.mxu0 %v456
    %485 = vmatpush.msra.mxu0 %v455
    %486 = vmatpush.msra.mxu0 %v454
    %487 = vmatpush.msra.mxu0 %v453
    %488 = vmatpush.msra.mxu0 %v452
    %489 = vmatmul.f32.gmra.mxu0 %v450
    %v490 = vpop.f32.mrf.mxu0
    %v491 = vadd.f32 %v471, %v490
    %492 = vdwg.mxu0
    %vm493 = vcmp.gt.f32.partialorder %v491, 0.0
    %v494 = vmul.f32 %v491, 0.2
    %v495 = vsel %vm493, %v491, %v494
    %s496 = scalar_lea.vmem [#allocation2], 640
    %v497 = vld [vmem:[%s496] sm:$0xff]
    %v498 = vld [vmem:[%s496 + $0x8] sm:$0xff]
    %v499 = vld [vmem:[%s496 + $0x10] sm:$0xff]
    %v500 = vld [vmem:[%s496 + $0x18] sm:$0xff]
    %v501 = vld [vmem:[%s496 + $0x20] sm:$0xff]
    %v502 = vld [vmem:[%s496 + $0x28] sm:$0xff]
    %v503 = vld [vmem:[%s496 + $0x30] sm:$0xff]
    %v504 = vld [vmem:[%s496 + $0x38] sm:$0xff]
    %v505 = vld [vmem:[%s496 + $0x40] sm:$0xff]
    %v506 = vld [vmem:[%s496 + $0x48] sm:$0xff]
    %v507 = vld [vmem:[%s496 + $0x50] sm:$0xff]
    %v508 = vld [vmem:[%s496 + $0x58] sm:$0xff]
    %v509 = vld [vmem:[%s496 + $0x60] sm:$0xff]
    %v510 = vld [vmem:[%s496 + $0x68] sm:$0xff]
    %v511 = vld [vmem:[%s496 + $0x70] sm:$0xff]
    %v512 = vld [vmem:[%s496 + $0x78] sm:$0xff]
    %s513 = scalar_lea.vmem %s1, 14
    %v514 = vld [vmem:[%s513] sm:$0x1]
    %v516 = vperm.slane %v514, 0
    %518 = vmatpush.msra.mxu0 %v512
    %519 = vmatpush.msra.mxu0 %v511
    %520 = vmatpush.msra.mxu0 %v510
    %521 = vmatpush.msra.mxu0 %v509
    %522 = vmatpush.msra.mxu0 %v508
    %523 = vmatpush.msra.mxu0 %v507
    %524 = vmatpush.msra.mxu0 %v506
    %525 = vmatpush.msra.mxu0 %v505
    %526 = vmatpush.msra.mxu0 %v504
    %527 = vmatpush.msra.mxu0 %v503
    %528 = vmatpush.msra.mxu0 %v502
    %529 = vmatpush.msra.mxu0 %v501
    %530 = vmatpush.msra.mxu0 %v500
    %531 = vmatpush.msra.mxu0 %v499
    %532 = vmatpush.msra.mxu0 %v498
    %533 = vmatpush.msra.mxu0 %v497
    %534 = vmatmul.f32.gmra.mxu0 %v495
    %v535 = vpop.f32.mrf.mxu0
    %v536 = vadd.f32 %v516, %v535
    %537 = vdwg.mxu0
    %v538 = vtanh.pop %v536
    %s539 = scalar_lea.vmem [#allocation2], 768
    %v540 = vld [vmem:[%s539] sm:$0xff]
    %v541 = vld [vmem:[%s539 + $0x8] sm:$0xff]
    %v542 = vld [vmem:[%s539 + $0x10] sm:$0xff]
    %v543 = vld [vmem:[%s539 + $0x18] sm:$0xff]
    %v544 = vld [vmem:[%s539 + $0x20] sm:$0xff]
    %v545 = vld [vmem:[%s539 + $0x28] sm:$0xff]
    %v546 = vld [vmem:[%s539 + $0x30] sm:$0xff]
    %v547 = vld [vmem:[%s539 + $0x38] sm:$0xff]
    %v548 = vld [vmem:[%s539 + $0x40] sm:$0xff]
    %v549 = vld [vmem:[%s539 + $0x48] sm:$0xff]
    %v550 = vld [vmem:[%s539 + $0x50] sm:$0xff]
    %v551 = vld [vmem:[%s539 + $0x58] sm:$0xff]
    %v552 = vld [vmem:[%s539 + $0x60] sm:$0xff]
    %v553 = vld [vmem:[%s539 + $0x68] sm:$0xff]
    %v554 = vld [vmem:[%s539 + $0x70] sm:$0xff]
    %v555 = vld [vmem:[%s539 + $0x78] sm:$0xff]
    %s556 = scalar_lea.vmem %s1, 16
    %v557 = vld [vmem:[%s556] sm:$0x1]
    %v559 = vperm.slane %v557, 0
    %561 = vmatpush.msra.mxu0 %v555
    %562 = vmatpush.msra.mxu0 %v554
    %563 = vmatpush.msra.mxu0 %v553
    %564 = vmatpush.msra.mxu0 %v552
    %565 = vmatpush.msra.mxu0 %v551
    %566 = vmatpush.msra.mxu0 %v550
    %567 = vmatpush.msra.mxu0 %v549
    %568 = vmatpush.msra.mxu0 %v548
    %569 = vmatpush.msra.mxu0 %v547
    %570 = vmatpush.msra.mxu0 %v546
    %571 = vmatpush.msra.mxu0 %v545
    %572 = vmatpush.msra.mxu0 %v544
    %573 = vmatpush.msra.mxu0 %v543
    %574 = vmatpush.msra.mxu0 %v542
    %575 = vmatpush.msra.mxu0 %v541
    %576 = vmatpush.msra.mxu0 %v540
    %577 = vmatmul.f32.gmra.mxu0 %v538
    %v578 = vpop.f32.mrf.mxu0
    %v579 = vadd.f32 %v559, %v578
    %580 = vdwg.mxu0
    %vm581 = vcmp.gt.f32.partialorder %v579, 0.0
    %v582 = vmul.f32 %v579, 0.2
    %v583 = vsel %vm581, %v579, %v582
    %s584 = scalar_lea.vmem [#allocation2], 896
    %v585 = vld [vmem:[%s584] sm:$0xff]
    %v586 = vld [vmem:[%s584 + $0x8] sm:$0xff]
    %v587 = vld [vmem:[%s584 + $0x10] sm:$0xff]
    %v588 = vld [vmem:[%s584 + $0x18] sm:$0xff]
    %v589 = vld [vmem:[%s584 + $0x20] sm:$0xff]
    %v590 = vld [vmem:[%s584 + $0x28] sm:$0xff]
    %v591 = vld [vmem:[%s584 + $0x30] sm:$0xff]
    %v592 = vld [vmem:[%s584 + $0x38] sm:$0xff]
    %v593 = vld [vmem:[%s584 + $0x40] sm:$0xff]
    %v594 = vld [vmem:[%s584 + $0x48] sm:$0xff]
    %v595 = vld [vmem:[%s584 + $0x50] sm:$0xff]
    %v596 = vld [vmem:[%s584 + $0x58] sm:$0xff]
    %v597 = vld [vmem:[%s584 + $0x60] sm:$0xff]
    %v598 = vld [vmem:[%s584 + $0x68] sm:$0xff]
    %v599 = vld [vmem:[%s584 + $0x70] sm:$0xff]
    %v600 = vld [vmem:[%s584 + $0x78] sm:$0xff]
    %s601 = scalar_lea.vmem %s1, 18
    %v602 = vld [vmem:[%s601] sm:$0x1]
    %v604 = vperm.slane %v602, 0
    %606 = vmatpush.msra.mxu0 %v600
    %607 = vmatpush.msra.mxu0 %v599
    %608 = vmatpush.msra.mxu0 %v598
    %609 = vmatpush.msra.mxu0 %v597
    %610 = vmatpush.msra.mxu0 %v596
    %611 = vmatpush.msra.mxu0 %v595
    %612 = vmatpush.msra.mxu0 %v594
    %613 = vmatpush.msra.mxu0 %v593
    %614 = vmatpush.msra.mxu0 %v592
    %615 = vmatpush.msra.mxu0 %v591
    %616 = vmatpush.msra.mxu0 %v590
    %617 = vmatpush.msra.mxu0 %v589
    %618 = vmatpush.msra.mxu0 %v588
    %619 = vmatpush.msra.mxu0 %v587
    %620 = vmatpush.msra.mxu0 %v586
    %621 = vmatpush.msra.mxu0 %v585
    %622 = vmatmul.f32.gmra.mxu0 %v583
    %v623 = vpop.f32.mrf.mxu0
    %v624 = vadd.f32 %v604, %v623
    %625 = vdwg.mxu0
    %v626 = vrot.slane %v624, 4
    %v627 = vadd.f32 %v624, %v626
    %v628 = vrot.slane %v627, 2
    %v629 = vadd.f32 %v627, %v628
    %v630 = vrot.slane %v629, 1
    %v631 = vadd.f32 %v629, %v630
    %v632 = vrcp.pop 8.0
    %v633 = vmul.f32 8.0, %v632
    %v634 = vsub.f32 1.0, %v633
    %v635 = vmul.f32 %v632, %v634
    %v636 = vadd.f32 %v632, %v635
    %vm637 = vweird.f32 %v632
    %v638 = vsel %vm637, %v632, %v636
    %v639 = vmul.f32 %v631, %v638
    %v640 = vsub.f32 %v624, %v639
    %v641 = vmul.f32 %v640, %v640
    %v642 = vrot.slane %v641, 4
    %v643 = vadd.f32 %v641, %v642
    %v644 = vrot.slane %v643, 2
    %v645 = vadd.f32 %v643, %v644
    %v646 = vrot.slane %v645, 1
    %v647 = vadd.f32 %v645, %v646
    %v648 = vmul.f32 %v647, %v638
    %v649 = vadd.f32 %v648, 0.8
    %v650 = vrsqrt.pop %v649
    %v651 = vmul.f32 %v650, %v649
    %v652 = vmul.f32 %v651, %v650
    %v653 = vmul.f32 0.5, %v652
    %v654 = vsub.f32 1.5, %v653
    %v655 = vmul.f32 %v650, %v654
    %vm656 = vweird.f32 %v649
    %vm657 = vweird.f32 %v650
    %vm658 = vmor %vm656, %vm657
    %v659 = vsel %vm658, %v650, %v655
    %v660 = vmul.f32 %v640, %v659
    %v661 = vld [vmem:[#allocation6] sm:$0x1]
    %v663 = vperm.slane %v661, 0
    %v665 = vmul.f32 %v660, %v663
    %v666 = vld [vmem:[#allocation9] sm:$0x1]
    %v668 = vperm.slane %v666, 0
    %v670 = vadd.f32 %v665, %v668
    %vm671 = vcmp.gt.f32.partialorder %v670, 0.0
    %v672 = vmul.f32 %v670, 0.2
    %v673 = vsel %vm671, %v670, %v672
    %s674 = scalar_lea.vmem [#allocation2], 1024
    %v675 = vld [vmem:[%s674] sm:$0xff]
    %v676 = vld [vmem:[%s674 + $0x8] sm:$0xff]
    %v677 = vld [vmem:[%s674 + $0x10] sm:$0xff]
    %v678 = vld [vmem:[%s674 + $0x18] sm:$0xff]
    %v679 = vld [vmem:[%s674 + $0x20] sm:$0xff]
    %v680 = vld [vmem:[%s674 + $0x28] sm:$0xff]
    %v681 = vld [vmem:[%s674 + $0x30] sm:$0xff]
    %v682 = vld [vmem:[%s674 + $0x38] sm:$0xff]
    %v683 = vld [vmem:[%s674 + $0x40] sm:$0xff]
    %v684 = vld [vmem:[%s674 + $0x48] sm:$0xff]
    %v685 = vld [vmem:[%s674 + $0x50] sm:$0xff]
    %v686 = vld [vmem:[%s674 + $0x58] sm:$0xff]
    %v687 = vld [vmem:[%s674 + $0x60] sm:$0xff]
    %v688 = vld [vmem:[%s674 + $0x68] sm:$0xff]
    %v689 = vld [vmem:[%s674 + $0x70] sm:$0xff]
    %v690 = vld [vmem:[%s674 + $0x78] sm:$0xff]
    %s691 = scalar_lea.vmem %s1, 20
    %v692 = vld [vmem:[%s691] sm:$0x1]
    %v694 = vperm.slane %v692, 0
    %696 = vmatpush.msra.mxu0 %v690
    %697 = vmatpush.msra.mxu0 %v689
    %698 = vmatpush.msra.mxu0 %v688
    %699 = vmatpush.msra.mxu0 %v687
    %700 = vmatpush.msra.mxu0 %v686
    %701 = vmatpush.msra.mxu0 %v685
    %702 = vmatpush.msra.mxu0 %v684
    %703 = vmatpush.msra.mxu0 %v683
    %704 = vmatpush.msra.mxu0 %v682
    %705 = vmatpush.msra.mxu0 %v681
    %706 = vmatpush.msra.mxu0 %v680
    %707 = vmatpush.msra.mxu0 %v679
    %708 = vmatpush.msra.mxu0 %v678
    %709 = vmatpush.msra.mxu0 %v677
    %710 = vmatpush.msra.mxu0 %v676
    %711 = vmatpush.msra.mxu0 %v675
    %712 = vmatmul.f32.gmra.mxu0 %v673
    %v713 = vpop.f32.mrf.mxu0
    %v714 = vadd.f32 %v694, %v713
    %715 = vdwg.mxu0
    %v716 = vrot.slane %v714, 4
    %v717 = vadd.f32 %v714, %v716
    %v718 = vrot.slane %v717, 2
    %v719 = vadd.f32 %v717, %v718
    %v720 = vrot.slane %v719, 1
    %v721 = vadd.f32 %v719, %v720
    %v722 = vmul.f32 %v721, %v638
    %v723 = vsub.f32 %v714, %v722
    %v724 = vmul.f32 %v723, %v723
    %v725 = vrot.slane %v724, 4
    %v726 = vadd.f32 %v724, %v725
    %v727 = vrot.slane %v726, 2
    %v728 = vadd.f32 %v726, %v727
    %v729 = vrot.slane %v728, 1
    %v730 = vadd.f32 %v728, %v729
    %v731 = vmul.f32 %v730, %v638
    %v732 = vadd.f32 %v731, 0.8
    %v733 = vrsqrt.pop %v732
    %v734 = vmul.f32 %v733, %v732
    %v735 = vmul.f32 %v734, %v733
    %v736 = vmul.f32 0.5, %v735
    %v737 = vsub.f32 1.5, %v736
    %v738 = vmul.f32 %v733, %v737
    %vm739 = vweird.f32 %v732
    %vm740 = vweird.f32 %v733
    %vm741 = vmor %vm739, %vm740
    %v742 = vsel %vm741, %v733, %v738
    %v743 = vmul.f32 %v723, %v742
    %s744 = scalar_lea.vmem [#allocation6], 2
    %v745 = vld [vmem:[%s744] sm:$0x1]
    %v747 = vperm.slane %v745, 0
    %v749 = vmul.f32 %v743, %v747
    %s750 = scalar_lea.vmem [#allocation9], 2
    %v751 = vld [vmem:[%s750] sm:$0x1]
    %v753 = vperm.slane %v751, 0
    %v755 = vadd.f32 %v749, %v753
    %vm756 = vcmp.gt.f32.partialorder %v755, 0.0
    %v757 = vmul.f32 %v755, 0.2
    %v758 = vsel %vm756, %v755, %v757
    %s759 = scalar_lea.vmem [#allocation2], 1152
    %v760 = vld [vmem:[%s759] sm:$0xff]
    %v761 = vld [vmem:[%s759 + $0x8] sm:$0xff]
    %v762 = vld [vmem:[%s759 + $0x10] sm:$0xff]
    %v763 = vld [vmem:[%s759 + $0x18] sm:$0xff]
    %v764 = vld [vmem:[%s759 + $0x20] sm:$0xff]
    %v765 = vld [vmem:[%s759 + $0x28] sm:$0xff]
    %v766 = vld [vmem:[%s759 + $0x30] sm:$0xff]
    %v767 = vld [vmem:[%s759 + $0x38] sm:$0xff]
    %v768 = vld [vmem:[%s759 + $0x40] sm:$0xff]
    %v769 = vld [vmem:[%s759 + $0x48] sm:$0xff]
    %v770 = vld [vmem:[%s759 + $0x50] sm:$0xff]
    %v771 = vld [vmem:[%s759 + $0x58] sm:$0xff]
    %v772 = vld [vmem:[%s759 + $0x60] sm:$0xff]
    %v773 = vld [vmem:[%s759 + $0x68] sm:$0xff]
    %v774 = vld [vmem:[%s759 + $0x70] sm:$0xff]
    %v775 = vld [vmem:[%s759 + $0x78] sm:$0xff]
    %s776 = scalar_lea.vmem %s1, 22
    %v777 = vld [vmem:[%s776] sm:$0x1]
    %v779 = vperm.slane %v777, 0
    %781 = vmatpush.msra.mxu0 %v775
    %782 = vmatpush.msra.mxu0 %v774
    %783 = vmatpush.msra.mxu0 %v773
    %784 = vmatpush.msra.mxu0 %v772
    %785 = vmatpush.msra.mxu0 %v771
    %786 = vmatpush.msra.mxu0 %v770
    %787 = vmatpush.msra.mxu0 %v769
    %788 = vmatpush.msra.mxu0 %v768
    %789 = vmatpush.msra.mxu0 %v767
    %790 = vmatpush.msra.mxu0 %v766
    %791 = vmatpush.msra.mxu0 %v765
    %792 = vmatpush.msra.mxu0 %v764
    %793 = vmatpush.msra.mxu0 %v763
    %794 = vmatpush.msra.mxu0 %v762
    %795 = vmatpush.msra.mxu0 %v761
    %796 = vmatpush.msra.mxu0 %v760
    %797 = vmatmul.f32.gmra.mxu0 %v758
    %v798 = vpop.f32.mrf.mxu0
    %v799 = vadd.f32 %v779, %v798
    %800 = vdwg.mxu0
    %v801 = vrot.slane %v799, 4
    %v802 = vadd.f32 %v799, %v801
    %v803 = vrot.slane %v802, 2
    %v804 = vadd.f32 %v802, %v803
    %v805 = vrot.slane %v804, 1
    %v806 = vadd.f32 %v804, %v805
    %v807 = vmul.f32 %v806, %v638
    %v808 = vsub.f32 %v799, %v807
    %v809 = vmul.f32 %v808, %v808
    %v810 = vrot.slane %v809, 4
    %v811 = vadd.f32 %v809, %v810
    %v812 = vrot.slane %v811, 2
    %v813 = vadd.f32 %v811, %v812
    %v814 = vrot.slane %v813, 1
    %v815 = vadd.f32 %v813, %v814
    %v816 = vmul.f32 %v815, %v638
    %v817 = vadd.f32 %v816, 0.8
    %v818 = vrsqrt.pop %v817
    %v819 = vmul.f32 %v818, %v817
    %v820 = vmul.f32 %v819, %v818
    %v821 = vmul.f32 0.5, %v820
    %v822 = vsub.f32 1.5, %v821
    %v823 = vmul.f32 %v818, %v822
    %vm824 = vweird.f32 %v817
    %vm825 = vweird.f32 %v818
    %vm826 = vmor %vm824, %vm825
    %v827 = vsel %vm826, %v818, %v823
    %v828 = vmul.f32 %v808, %v827
    %s829 = scalar_lea.vmem [#allocation6], 4
    %v830 = vld [vmem:[%s829] sm:$0x1]
    %v832 = vperm.slane %v830, 0
    %v834 = vmul.f32 %v828, %v832
    %s835 = scalar_lea.vmem [#allocation9], 4
    %v836 = vld [vmem:[%s835] sm:$0x1]
    %v838 = vperm.slane %v836, 0
    %v840 = vadd.f32 %v834, %v838
    %vm841 = vcmp.gt.f32.partialorder %v840, 0.0
    %v842 = vmul.f32 %v840, 0.2
    %v843 = vsel %vm841, %v840, %v842
    %s844 = scalar_lea.vmem [#allocation2], 1280
    %v845 = vld [vmem:[%s844] sm:$0xff]
    %v846 = vld [vmem:[%s844 + $0x8] sm:$0xff]
    %v847 = vld [vmem:[%s844 + $0x10] sm:$0xff]
    %v848 = vld [vmem:[%s844 + $0x18] sm:$0xff]
    %v849 = vld [vmem:[%s844 + $0x20] sm:$0xff]
    %v850 = vld [vmem:[%s844 + $0x28] sm:$0xff]
    %v851 = vld [vmem:[%s844 + $0x30] sm:$0xff]
    %v852 = vld [vmem:[%s844 + $0x38] sm:$0xff]
    %v853 = vld [vmem:[%s844 + $0x40] sm:$0xff]
    %v854 = vld [vmem:[%s844 + $0x48] sm:$0xff]
    %v855 = vld [vmem:[%s844 + $0x50] sm:$0xff]
    %v856 = vld [vmem:[%s844 + $0x58] sm:$0xff]
    %v857 = vld [vmem:[%s844 + $0x60] sm:$0xff]
    %v858 = vld [vmem:[%s844 + $0x68] sm:$0xff]
    %v859 = vld [vmem:[%s844 + $0x70] sm:$0xff]
    %v860 = vld [vmem:[%s844 + $0x78] sm:$0xff]
    %s861 = scalar_lea.vmem %s1, 24
    %v862 = vld [vmem:[%s861] sm:$0x1]
    %v864 = vperm.slane %v862, 0
    %866 = vmatpush.msra.mxu0 %v860
    %867 = vmatpush.msra.mxu0 %v859
    %868 = vmatpush.msra.mxu0 %v858
    %869 = vmatpush.msra.mxu0 %v857
    %870 = vmatpush.msra.mxu0 %v856
    %871 = vmatpush.msra.mxu0 %v855
    %872 = vmatpush.msra.mxu0 %v854
    %873 = vmatpush.msra.mxu0 %v853
    %874 = vmatpush.msra.mxu0 %v852
    %875 = vmatpush.msra.mxu0 %v851
    %876 = vmatpush.msra.mxu0 %v850
    %877 = vmatpush.msra.mxu0 %v849
    %878 = vmatpush.msra.mxu0 %v848
    %879 = vmatpush.msra.mxu0 %v847
    %880 = vmatpush.msra.mxu0 %v846
    %881 = vmatpush.msra.mxu0 %v845
    %882 = vmatmul.f32.gmra.mxu0 %v843
    %v883 = vpop.f32.mrf.mxu0
    %v884 = vadd.f32 %v864, %v883
    %885 = vdwg.mxu0
    %v886 = vrot.slane %v884, 4
    %v887 = vadd.f32 %v884, %v886
    %v888 = vrot.slane %v887, 2
    %v889 = vadd.f32 %v887, %v888
    %v890 = vrot.slane %v889, 1
    %v891 = vadd.f32 %v889, %v890
    %v892 = vmul.f32 %v891, %v638
    %v893 = vsub.f32 %v884, %v892
    %v894 = vmul.f32 %v893, %v893
    %v895 = vrot.slane %v894, 4
    %v896 = vadd.f32 %v894, %v895
    %v897 = vrot.slane %v896, 2
    %v898 = vadd.f32 %v896, %v897
    %v899 = vrot.slane %v898, 1
    %v900 = vadd.f32 %v898, %v899
    %v901 = vmul.f32 %v900, %v638
    %v902 = vadd.f32 %v901, 0.8
    %v903 = vrsqrt.pop %v902
    %v904 = vmul.f32 %v903, %v902
    %v905 = vmul.f32 %v904, %v903
    %v906 = vmul.f32 0.5, %v905
    %v907 = vsub.f32 1.5, %v906
    %v908 = vmul.f32 %v903, %v907
    %vm909 = vweird.f32 %v902
    %vm910 = vweird.f32 %v903
    %vm911 = vmor %vm909, %vm910
    %v912 = vsel %vm911, %v903, %v908
    %v913 = vmul.f32 %v893, %v912
    %s914 = scalar_lea.vmem [#allocation6], 6
    %v915 = vld [vmem:[%s914] sm:$0x1]
    %v917 = vperm.slane %v915, 0
    %v919 = vmul.f32 %v913, %v917
    %s920 = scalar_lea.vmem [#allocation9], 6
    %v921 = vld [vmem:[%s920] sm:$0x1]
    %v923 = vperm.slane %v921, 0
    %v925 = vadd.f32 %v919, %v923
    %vm926 = vcmp.gt.f32.partialorder %v925, 0.0
    %v927 = vmul.f32 %v925, 0.2
    %v928 = vsel %vm926, %v925, %v927
    %s929 = scalar_lea.vmem [#allocation2], 1408
    %v930 = vld [vmem:[%s929] sm:$0xff]
    %v931 = vld [vmem:[%s929 + $0x8] sm:$0xff]
    %v932 = vld [vmem:[%s929 + $0x10] sm:$0xff]
    %v933 = vld [vmem:[%s929 + $0x18] sm:$0xff]
    %v934 = vld [vmem:[%s929 + $0x20] sm:$0xff]
    %v935 = vld [vmem:[%s929 + $0x28] sm:$0xff]
    %v936 = vld [vmem:[%s929 + $0x30] sm:$0xff]
    %v937 = vld [vmem:[%s929 + $0x38] sm:$0xff]
    %v938 = vld [vmem:[%s929 + $0x40] sm:$0xff]
    %v939 = vld [vmem:[%s929 + $0x48] sm:$0xff]
    %v940 = vld [vmem:[%s929 + $0x50] sm:$0xff]
    %v941 = vld [vmem:[%s929 + $0x58] sm:$0xff]
    %v942 = vld [vmem:[%s929 + $0x60] sm:$0xff]
    %v943 = vld [vmem:[%s929 + $0x68] sm:$0xff]
    %v944 = vld [vmem:[%s929 + $0x70] sm:$0xff]
    %v945 = vld [vmem:[%s929 + $0x78] sm:$0xff]
    %s946 = scalar_lea.vmem %s1, 26
    %v947 = vld [vmem:[%s946] sm:$0x1]
    %v949 = vperm.slane %v947, 0
    %951 = vmatpush.msra.mxu0 %v945
    %952 = vmatpush.msra.mxu0 %v944
    %953 = vmatpush.msra.mxu0 %v943
    %954 = vmatpush.msra.mxu0 %v942
    %955 = vmatpush.msra.mxu0 %v941
    %956 = vmatpush.msra.mxu0 %v940
    %957 = vmatpush.msra.mxu0 %v939
    %958 = vmatpush.msra.mxu0 %v938
    %959 = vmatpush.msra.mxu0 %v937
    %960 = vmatpush.msra.mxu0 %v936
    %961 = vmatpush.msra.mxu0 %v935
    %962 = vmatpush.msra.mxu0 %v934
    %963 = vmatpush.msra.mxu0 %v933
    %964 = vmatpush.msra.mxu0 %v932
    %965 = vmatpush.msra.mxu0 %v931
    %966 = vmatpush.msra.mxu0 %v930
    %967 = vmatmul.f32.gmra.mxu0 %v928
    %v968 = vpop.f32.mrf.mxu0
    %v969 = vadd.f32 %v949, %v968
    %970 = vdwg.mxu0
    %v971 = vrot.slane %v969, 4
    %v972 = vadd.f32 %v969, %v971
    %v973 = vrot.slane %v972, 2
    %v974 = vadd.f32 %v972, %v973
    %v975 = vrot.slane %v974, 1
    %v976 = vadd.f32 %v974, %v975
    %v977 = vmul.f32 %v976, %v638
    %v978 = vsub.f32 %v969, %v977
    %v979 = vmul.f32 %v978, %v978
    %v980 = vrot.slane %v979, 4
    %v981 = vadd.f32 %v979, %v980
    %v982 = vrot.slane %v981, 2
    %v983 = vadd.f32 %v981, %v982
    %v984 = vrot.slane %v983, 1
    %v985 = vadd.f32 %v983, %v984
    %v986 = vmul.f32 %v985, %v638
    %v987 = vadd.f32 %v986, 0.8
    %v988 = vrsqrt.pop %v987
    %v989 = vmul.f32 %v988, %v987
    %v990 = vmul.f32 %v989, %v988
    %v991 = vmul.f32 0.5, %v990
    %v992 = vsub.f32 1.5, %v991
    %v993 = vmul.f32 %v988, %v992
    %vm994 = vweird.f32 %v987
    %vm995 = vweird.f32 %v988
    %vm996 = vmor %vm994, %vm995
    %v997 = vsel %vm996, %v988, %v993
    %v998 = vmul.f32 %v978, %v997
    %s999 = scalar_lea.vmem [#allocation6], 8
    %v1000 = vld [vmem:[%s999] sm:$0x1]
    %v1002 = vperm.slane %v1000, 0
    %v1004 = vmul.f32 %v998, %v1002
    %s1005 = scalar_lea.vmem [#allocation9], 8
    %v1006 = vld [vmem:[%s1005] sm:$0x1]
    %v1008 = vperm.slane %v1006, 0
    %v1010 = vadd.f32 %v1004, %v1008
    %vm1011 = vcmp.gt.f32.partialorder %v1010, 0.0
    %v1012 = vmul.f32 %v1010, 0.2
    %v1013 = vsel %vm1011, %v1010, %v1012
    %s1014 = scalar_lea.vmem [#allocation3], 256
    %v1015 = vld [vmem:[%s1014] sm:$0xff]
    %v1016 = vld [vmem:[%s1014 + $0x8] sm:$0xff]
    %v1017 = vld [vmem:[%s1014 + $0x10] sm:$0xff]
    %v1018 = vld [vmem:[%s1014 + $0x18] sm:$0xff]
    %v1019 = vld [vmem:[%s1014 + $0x20] sm:$0xff]
    %v1020 = vld [vmem:[%s1014 + $0x28] sm:$0xff]
    %v1021 = vld [vmem:[%s1014 + $0x30] sm:$0xff]
    %v1022 = vld [vmem:[%s1014 + $0x38] sm:$0xff]
    %v1023 = vld [vmem:[%s1014 + $0x40] sm:$0xff]
    %v1024 = vld [vmem:[%s1014 + $0x48] sm:$0xff]
    %v1025 = vld [vmem:[%s1014 + $0x50] sm:$0xff]
    %v1026 = vld [vmem:[%s1014 + $0x58] sm:$0xff]
    %v1027 = vld [vmem:[%s1014 + $0x60] sm:$0xff]
    %v1028 = vld [vmem:[%s1014 + $0x68] sm:$0xff]
    %v1029 = vld [vmem:[%s1014 + $0x70] sm:$0xff]
    %v1030 = vld [vmem:[%s1014 + $0x78] sm:$0xff]
    %v1031 = vld [vmem:[%s1014 + $0x80] sm:$0xff]
    %v1032 = vld [vmem:[%s1014 + $0x88] sm:$0xff]
    %v1033 = vld [vmem:[%s1014 + $0x90] sm:$0xff]
    %v1034 = vld [vmem:[%s1014 + $0x98] sm:$0xff]
    %v1035 = vld [vmem:[%s1014 + $0xa0] sm:$0xff]
    %v1036 = vld [vmem:[%s1014 + $0xa8] sm:$0xff]
    %v1037 = vld [vmem:[%s1014 + $0xb0] sm:$0xff]
    %v1038 = vld [vmem:[%s1014 + $0xb8] sm:$0xff]
    %v1039 = vld [vmem:[%s1014 + $0xc0] sm:$0xff]
    %v1040 = vld [vmem:[%s1014 + $0xc8] sm:$0xff]
    %v1041 = vld [vmem:[%s1014 + $0xd0] sm:$0xff]
    %v1042 = vld [vmem:[%s1014 + $0xd8] sm:$0xff]
    %v1043 = vld [vmem:[%s1014 + $0xe0] sm:$0xff]
    %v1044 = vld [vmem:[%s1014 + $0xe8] sm:$0xff]
    %v1045 = vld [vmem:[%s1014 + $0xf0] sm:$0xff]
    %v1046 = vld [vmem:[%s1014 + $0xf8] sm:$0xff]
    %s1047 = scalar_lea.vmem %s1, 28
    %v1048 = vld [vmem:[%s1047] sm:$0x3]
    %v1050 = vperm.slane %v1048, 0
    %v1051 = vperm.slane %v1048, 1
    %1054 = vmatpush.msra.mxu0 %v1045
    %1055 = vmatpush.msra.mxu0 %v1043
    %1056 = vmatpush.msra.mxu0 %v1041
    %1057 = vmatpush.msra.mxu0 %v1039
    %1058 = vmatpush.msra.mxu0 %v1037
    %1059 = vmatpush.msra.mxu0 %v1035
    %1060 = vmatpush.msra.mxu0 %v1033
    %1061 = vmatpush.msra.mxu0 %v1031
    %1062 = vmatpush.msra.mxu0 %v1029
    %1063 = vmatpush.msra.mxu0 %v1027
    %1064 = vmatpush.msra.mxu0 %v1025
    %1065 = vmatpush.msra.mxu0 %v1023
    %1066 = vmatpush.msra.mxu0 %v1021
    %1067 = vmatpush.msra.mxu0 %v1019
    %1068 = vmatpush.msra.mxu0 %v1017
    %1069 = vmatpush.msra.mxu0 %v1015
    %1070 = vmatmul.f32.gmra.mxu0 %v1013
    %v1071 = vpop.f32.mrf.mxu0
    %v1072 = vadd.f32 %v1050, %v1071
    %1073 = vdwg.mxu0
    %1074 = vmatpush.msra.mxu0 %v1046
    %1075 = vmatpush.msra.mxu0 %v1044
    %1076 = vmatpush.msra.mxu0 %v1042
    %1077 = vmatpush.msra.mxu0 %v1040
    %1078 = vmatpush.msra.mxu0 %v1038
    %1079 = vmatpush.msra.mxu0 %v1036
    %1080 = vmatpush.msra.mxu0 %v1034
    %1081 = vmatpush.msra.mxu0 %v1032
    %1082 = vmatpush.msra.mxu0 %v1030
    %1083 = vmatpush.msra.mxu0 %v1028
    %1084 = vmatpush.msra.mxu0 %v1026
    %1085 = vmatpush.msra.mxu0 %v1024
    %1086 = vmatpush.msra.mxu0 %v1022
    %1087 = vmatpush.msra.mxu0 %v1020
    %1088 = vmatpush.msra.mxu0 %v1018
    %1089 = vmatpush.msra.mxu0 %v1016
    %1090 = vmatmul.f32.gmra.mxu0 %v1013
    %v1091 = vpop.f32.mrf.mxu0
    %v1092 = vadd.f32 %v1051, %v1091
    %1093 = vdwg.mxu0
    %v1094 = vrot.slane %v1072, 4
    %v1095 = vadd.f32 %v1072, %v1094
    %v1096 = vrot.slane %v1095, 2
    %v1097 = vadd.f32 %v1095, %v1096
    %v1098 = vrot.slane %v1097, 1
    %v1099 = vadd.f32 %v1097, %v1098
    %v1100 = vrot.slane %v1092, 4
    %v1101 = vadd.f32 %v1092, %v1100
    %v1102 = vrot.slane %v1101, 2
    %v1103 = vadd.f32 %v1101, %v1102
    %v1104 = vrot.slane %v1103, 1
    %v1105 = vadd.f32 %v1103, %v1104
    %v1106 = vmul.f32 %v1099, %v638
    %v1107 = vmul.f32 %v1105, %v638
    %v1108 = vsub.f32 %v1072, %v1106
    %v1109 = vsub.f32 %v1092, %v1107
    %v1110 = vmul.f32 %v1108, %v1108
    %v1111 = vmul.f32 %v1109, %v1109
    %v1112 = vrot.slane %v1110, 4
    %v1113 = vadd.f32 %v1110, %v1112
    %v1114 = vrot.slane %v1113, 2
    %v1115 = vadd.f32 %v1113, %v1114
    %v1116 = vrot.slane %v1115, 1
    %v1117 = vadd.f32 %v1115, %v1116
    %v1118 = vrot.slane %v1111, 4
    %v1119 = vadd.f32 %v1111, %v1118
    %v1120 = vrot.slane %v1119, 2
    %v1121 = vadd.f32 %v1119, %v1120
    %v1122 = vrot.slane %v1121, 1
    %v1123 = vadd.f32 %v1121, %v1122
    %v1124 = vmul.f32 %v1117, %v638
    %v1125 = vmul.f32 %v1123, %v638
    %v1126 = vadd.f32 %v1124, 0.8
    %v1127 = vadd.f32 %v1125, 0.8
    %v1128 = vrsqrt.pop %v1126
    %v1129 = vmul.f32 %v1128, %v1126
    %v1130 = vmul.f32 %v1129, %v1128
    %v1131 = vmul.f32 0.5, %v1130
    %v1132 = vsub.f32 1.5, %v1131
    %v1133 = vmul.f32 %v1128, %v1132
    %vm1134 = vweird.f32 %v1126
    %vm1135 = vweird.f32 %v1128
    %vm1136 = vmor %vm1134, %vm1135
    %v1137 = vsel %vm1136, %v1128, %v1133
    %v1138 = vrsqrt.pop %v1127
    %v1139 = vmul.f32 %v1138, %v1127
    %v1140 = vmul.f32 %v1139, %v1138
    %v1141 = vmul.f32 0.5, %v1140
    %v1142 = vsub.f32 1.5, %v1141
    %v1143 = vmul.f32 %v1138, %v1142
    %vm1144 = vweird.f32 %v1127
    %vm1145 = vweird.f32 %v1138
    %vm1146 = vmor %vm1144, %vm1145
    %v1147 = vsel %vm1146, %v1138, %v1143
    %v1148 = vmul.f32 %v1108, %v1137
    %v1149 = vmul.f32 %v1109, %v1147
    %s1150 = scalar_lea.vmem [#allocation6], 10
    %v1151 = vld [vmem:[%s1150] sm:$0x3]
    %v1153 = vperm.slane %v1151, 0
    %v1154 = vperm.slane %v1151, 1
    %v1157 = vmul.f32 %v1148, %v1153
    %v1158 = vmul.f32 %v1149, %v1154
    %s1159 = scalar_lea.vmem [#allocation9], 10
    %v1160 = vld [vmem:[%s1159] sm:$0x3]
    %v1162 = vperm.slane %v1160, 0
    %v1163 = vperm.slane %v1160, 1
    %v1166 = vadd.f32 %v1157, %v1162
    %v1167 = vadd.f32 %v1158, %v1163
    %vm1168 = vcmp.gt.f32.partialorder %v1166, 0.0
    %vm1169 = vcmp.gt.f32.partialorder %v1167, 0.0
    %v1170 = vmul.f32 %v1166, 0.2
    %v1171 = vmul.f32 %v1167, 0.2
    %v1172 = vsel %vm1168, %v1166, %v1170
    %v1173 = vsel %vm1169, %v1167, %v1171
    %s1174 = scalar_lea.vmem [#allocation4], 256
    %v1175 = vld [vmem:[%s1174] sm:$0xff]
    %v1176 = vld [vmem:[%s1174 + $0x8] sm:$0xff]
    %v1177 = vld [vmem:[%s1174 + $0x10] sm:$0xff]
    %v1178 = vld [vmem:[%s1174 + $0x18] sm:$0xff]
    %v1179 = vld [vmem:[%s1174 + $0x20] sm:$0xff]
    %v1180 = vld [vmem:[%s1174 + $0x28] sm:$0xff]
    %v1181 = vld [vmem:[%s1174 + $0x30] sm:$0xff]
    %v1182 = vld [vmem:[%s1174 + $0x38] sm:$0xff]
    %v1183 = vld [vmem:[%s1174 + $0x40] sm:$0xff]
    %v1184 = vld [vmem:[%s1174 + $0x48] sm:$0xff]
    %v1185 = vld [vmem:[%s1174 + $0x50] sm:$0xff]
    %v1186 = vld [vmem:[%s1174 + $0x58] sm:$0xff]
    %v1187 = vld [vmem:[%s1174 + $0x60] sm:$0xff]
    %v1188 = vld [vmem:[%s1174 + $0x68] sm:$0xff]
    %v1189 = vld [vmem:[%s1174 + $0x70] sm:$0xff]
    %v1190 = vld [vmem:[%s1174 + $0x78] sm:$0xff]
    %v1191 = vld [vmem:[%s1174 + $0x80] sm:$0xff]
    %v1192 = vld [vmem:[%s1174 + $0x88] sm:$0xff]
    %v1193 = vld [vmem:[%s1174 + $0x90] sm:$0xff]
    %v1194 = vld [vmem:[%s1174 + $0x98] sm:$0xff]
    %v1195 = vld [vmem:[%s1174 + $0xa0] sm:$0xff]
    %v1196 = vld [vmem:[%s1174 + $0xa8] sm:$0xff]
    %v1197 = vld [vmem:[%s1174 + $0xb0] sm:$0xff]
    %v1198 = vld [vmem:[%s1174 + $0xb8] sm:$0xff]
    %v1199 = vld [vmem:[%s1174 + $0xc0] sm:$0xff]
    %v1200 = vld [vmem:[%s1174 + $0xc8] sm:$0xff]
    %v1201 = vld [vmem:[%s1174 + $0xd0] sm:$0xff]
    %v1202 = vld [vmem:[%s1174 + $0xd8] sm:$0xff]
    %v1203 = vld [vmem:[%s1174 + $0xe0] sm:$0xff]
    %v1204 = vld [vmem:[%s1174 + $0xe8] sm:$0xff]
    %v1205 = vld [vmem:[%s1174 + $0xf0] sm:$0xff]
    %v1206 = vld [vmem:[%s1174 + $0xf8] sm:$0xff]
    %s1207 = scalar_lea.vmem %s1, 30
    %v1208 = vld [vmem:[%s1207] sm:$0x1]
    %v1210 = vperm.slane %v1208, 0
    %1212 = vmatpush.msra.mxu0 %v1190
    %1213 = vmatpush.msra.mxu0 %v1189
    %1214 = vmatpush.msra.mxu0 %v1188
    %1215 = vmatpush.msra.mxu0 %v1187
    %1216 = vmatpush.msra.mxu0 %v1186
    %1217 = vmatpush.msra.mxu0 %v1185
    %1218 = vmatpush.msra.mxu0 %v1184
    %1219 = vmatpush.msra.mxu0 %v1183
    %1220 = vmatpush.msra.mxu0 %v1182
    %1221 = vmatpush.msra.mxu0 %v1181
    %1222 = vmatpush.msra.mxu0 %v1180
    %1223 = vmatpush.msra.mxu0 %v1179
    %1224 = vmatpush.msra.mxu0 %v1178
    %1225 = vmatpush.msra.mxu0 %v1177
    %1226 = vmatpush.msra.mxu0 %v1176
    %1227 = vmatpush.msra.mxu0 %v1175
    %1228 = vmatmul.f32.gmra.mxu0 %v1172
    %v1229 = vpop.f32.mrf.mxu0
    %v1230 = vadd.f32 %v1210, %v1229
    %1231 = vdwg.mxu0
    %1232 = vmatpush.msra.mxu0 %v1206
    %1233 = vmatpush.msra.mxu0 %v1205
    %1234 = vmatpush.msra.mxu0 %v1204
    %1235 = vmatpush.msra.mxu0 %v1203
    %1236 = vmatpush.msra.mxu0 %v1202
    %1237 = vmatpush.msra.mxu0 %v1201
    %1238 = vmatpush.msra.mxu0 %v1200
    %1239 = vmatpush.msra.mxu0 %v1199
    %1240 = vmatpush.msra.mxu0 %v1198
    %1241 = vmatpush.msra.mxu0 %v1197
    %1242 = vmatpush.msra.mxu0 %v1196
    %1243 = vmatpush.msra.mxu0 %v1195
    %1244 = vmatpush.msra.mxu0 %v1194
    %1245 = vmatpush.msra.mxu0 %v1193
    %1246 = vmatpush.msra.mxu0 %v1192
    %1247 = vmatpush.msra.mxu0 %v1191
    %1248 = vmatmul.f32.gmra.mxu0 %v1173
    %v1249 = vpop.f32.mrf.mxu0
    %v1250 = vadd.f32 %v1230, %v1249
    %1251 = vdwg.mxu0
    %v1252 = vtanh.pop %v1250
    %1253 = vst [vmem:[#allocation11] sm:$0xff] %v1252
    // Predicated region
    $region38: #{autoencoder_forward.1} parent=1 // pred_check
      _
    $region39: #{autoencoder_forward.1} parent=1 // pred_check_branch
      %1255 = sbr.rel (0) target = $region41
    $region40: #{autoencoder_forward.1} parent=1 // pred_region
      %1257 = vsyncadd [#allocation8], 0
      %s1259 = sshll.u32 [#allocation11], 4
      %s1260 = int_to_ptr.vmem [resolvable:$true] %s1259
      %s1261 = sshll.u32 %s7, 4
      %s1262 = int_to_ptr.hbm [resolvable:$true] %s1261
      %1264 = dma.vmem_to_hbm [thread:$0]  %s1260, 128, %s1262, [#allocation8]
    $region41: #{autoencoder_forward.1} parent=1 // pred_fallthru
      _
    // Predicated region
    $region42: #{autoencoder_forward.1} parent=1 // pred_check
      _
    $region43: #{autoencoder_forward.1} parent=1 // pred_check_branch
      %1266 = sbr.rel (0) target = $region45
    $region44: #{autoencoder_forward.1} parent=1 // pred_region
      %1268 = dma.done [#allocation8], 128
    $region45: #{autoencoder_forward.1} parent=1 // pred_fallthru
      _
    %1269 = vsyncpa [#allocation7], 1
    %1270 = vsyncpa [#allocation10], 1
    %1271 = vsyncpa [#allocation8], 1
  %1272 = vsyncmov [#allocation5]
  %s1273 = vpop.sfrf %1272
  %p1274 = scmp.eq.s32.totalorder %s1273, 0
  %p1275 = pneg %p1274
  %1277 = shalt.err (%p1275)
  %s1278 = scalar_lea.sflag [#allocation5], 1
  %1279 = vsyncmov %s1278
  %s1280 = vpop.sfrf %1279
  %p1281 = scmp.eq.s32.totalorder %s1280, 0
  %p1282 = pneg %p1281
  %1284 = shalt.err (%p1282)
  %s1285 = scalar_lea.sflag [#allocation5], 2
  %1286 = vsyncmov %s1285
  %s1287 = vpop.sfrf %1286
  %p1288 = scmp.eq.s32.totalorder %s1287, 0
  %p1289 = pneg %p1288
  %1291 = shalt.err (%p1289)

</llo_original>
